<compile_context>
chip_gen: v5e
topology: v5e:2x2
jax: 0.10.0
libtpu: 0.0.40
codegen_flags: <defaults>
</compile_context>

<pallas_src>
import jax
import jax.numpy as jnp
from jax.experimental import pallas as pl
from jax.experimental.pallas import tpu as pltpu


def make_critic_lstm_kernel(seq_len: int, batch: int, state_dim: int,
                            hidden_dim: int, num_layers: int):
    """Builds the Pallas kernel body for static (S, B, D, H, L)."""
    S, B, D, H, L = seq_len, batch, state_dim, hidden_dim, num_layers

    def kernel(*refs):
        # refs layout:
        #   x_ref (B, S, D) batch-first (native module layout),
        #   w_cat_0 .. w_cat_{L-1}   stacked [W_ih; W_hh], (in_l + H, 4H),
        #   b_0 .. b_{L-1}           pre-summed b_ih + b_hh, (1, 4H),
        #   w_v (H, 1), b_v (1, 1),
        #   out_ref (B, S, 1)
        # All i/f/o gate columns of w_cat_* and b_* are pre-scaled by 0.5 host-side.
        x_ref = refs[0]
        wcat_refs = refs[1:1 + L]
        b_refs = refs[1 + L:1 + 2 * L]
        wv_ref = refs[1 + 2 * L]
        bv_ref = refs[2 + 2 * L]
        out_ref = refs[3 + 2 * L]

        x_all = x_ref[...]                                # (B, S, D), tiny
        w = [wcat_refs[l][...] for l in range(L)]         # (in_l + H, 4H)
        bias = [b_refs[l][...] for l in range(L)]         # (1, 4H)

        # Zero-initialized hidden/cell state, carried as register values through the
        # unrolled loop (no scratch read-modify-write).
        h = [jnp.zeros((B, H), jnp.float32) for _ in range(L)]
        c = [jnp.zeros((B, H), jnp.float32) for _ in range(L)]

        def cell(xh, w_l, b_l, c_prev):
            # Single fused (input | hidden) matmul per cell.
            gates = jnp.dot(xh, w_l, preferred_element_type=jnp.float32) + b_l
            # Single full-vreg EUP tanh; sigmoid gates recovered on the VPU:
            #   sigmoid(z) = 0.5 * tanh(z/2) + 0.5   (z/2 baked into weights/bias).
            th = jnp.tanh(gates)
            i_g = 0.5 * th[:, 0 * H:1 * H] + 0.5
            f_g = 0.5 * th[:, 1 * H:2 * H] + 0.5
            g_g = th[:, 2 * H:3 * H]
            o_g = 0.5 * th[:, 3 * H:4 * H] + 0.5
            c_new = f_g * c_prev + i_g * g_g
            h_new = o_g * jnp.tanh(c_new)
            return h_new, c_new

        h_top = []
        # Fully unrolled: one basic block — the scheduler overlaps the independent
        # layer-(l)@t and layer-(l-1)@(t+1) MXU->EUP->VPU chains automatically.
        for t in range(S):  # static indices everywhere
            inp = x_all[:, t, :]                          # (B, D) / (B, H)
            for l in range(L):
                xh = jnp.concatenate([inp, h[l]], axis=1)  # (B, in_l + H)
                h[l], c[l] = cell(xh, w[l], bias[l], c[l])
                inp = h[l]
            h_top.append(inp)

        # Value head: assemble batch-major (B*S, H) from register-resident per-step
        # hidden states, ONE matmul, ONE writeback already in (B, S, 1) order.
        h_bm = jnp.stack(h_top, axis=1).reshape(B * S, H)   # row = b*S + t
        v = (jnp.dot(h_bm, wv_ref[...], preferred_element_type=jnp.float32)
             + bv_ref[...])
        out_ref[...] = v.reshape(B, S, 1).astype(out_ref.dtype)

    return kernel


def pack_params(params):
    """One-time host-side weight prep (off the per-call path).

    - Stacks [W_ih; W_hh] into a single per-layer matrix (fused per-cell matmul).
    - Scales the i/f/o gate columns of weights and biases by 0.5 so the kernel
      needs only one tanh per cell (sigmoid-via-tanh identity), exact in math.
    """
    H, L = params["hidden_dim"], params["num_layers"]
    col_scale = jnp.concatenate([
        jnp.full((1, 2 * H), 0.5, jnp.float32),   # i, f
        jnp.ones((1, H), jnp.float32),            # g
        jnp.full((1, H), 0.5, jnp.float32),       # o
    ], axis=1)
    w_cat, b = [], []
    for l in range(L):
        w_cat.append(
            jnp.concatenate([params["w_ih"][l], params["w_hh"][l]], axis=0) * col_scale)
        b.append(params["b"][l] * col_scale)
    return {
        "w_cat": w_cat,
        "b": b,
        "w_v": params["w_v"],
        "b_v": params["b_v"],
        "hidden_dim": H,
        "num_layers": L,
    }


def critic_lstm_forward(x, packed):
    """x: (batch, seq, state_dim) batch-first float32. Returns value (batch, seq, 1)."""
    B, S, D = x.shape
    H = packed["hidden_dim"]
    L = packed["num_layers"]

    kernel = make_critic_lstm_kernel(S, B, D, H, L)
    vmem_spec = pl.BlockSpec(memory_space=pltpu.MemorySpace.VMEM)
    operands = [x, *packed["w_cat"], *packed["b"], packed["w_v"], packed["b_v"]]

    # Single gridless call; no transposes/reshapes outside the kernel.
    return pl.pallas_call(
        kernel,
        out_shape=jax.ShapeDtypeStruct((B, S, 1), jnp.float32),
        in_specs=[vmem_spec] * len(operands),
        out_specs=vmem_spec,
    )(*operands)


def init_params(key, state_dim, hidden_dim, num_layers):
    """Deterministic synthetic init mimicking PyTorch's U(-1/sqrt(H), 1/sqrt(H)).

    Kept in plain torch.nn.LSTM semantics (unscaled, unstacked) — used by the
    pure-JAX reference; the kernel consumes pack_params(init_params(...)).
    """
    H = hidden_dim
    bound = 1.0 / jnp.sqrt(jnp.float32(H))
    w_ih, w_hh, b = [], [], []
    for l in range(num_layers):
        in_l = state_dim if l == 0 else H
        key, k1, k2, k3, k4 = jax.random.split(key, 5)
        # PyTorch stores W_ih as (4H, in); we pre-transpose to (in, 4H) for x @ W.
        w_ih.append(jax.random.uniform(k1, (in_l, 4 * H), jnp.float32, -bound, bound))
        w_hh.append(jax.random.uniform(k2, (H, 4 * H), jnp.float32, -bound, bound))
        b_ih = jax.random.uniform(k3, (4 * H,), jnp.float32, -bound, bound)
        b_hh = jax.random.uniform(k4, (4 * H,), jnp.float32, -bound, bound)
        b.append((b_ih + b_hh).reshape(1, 4 * H))
    key, k5, k6 = jax.random.split(key, 3)
    w_v = jax.random.uniform(k5, (H, 1), jnp.float32, -bound, bound)
    b_v = jax.random.uniform(k6, (1, 1), jnp.float32, -bound, bound)
    return {
        "w_ih": w_ih,
        "w_hh": w_hh,
        "b": b,
        "w_v": w_v,
        "b_v": b_v,
        "hidden_dim": hidden_dim,
        "num_layers": num_layers,
    }


def critic_lstm_reference(x, params):
    """Pure-JAX reference of the same LSTM + value head (for correctness check)."""
    B, S, D = x.shape
    H, L = params["hidden_dim"], params["num_layers"]
    h = jnp.zeros((L, B, H), jnp.float32)
    c = jnp.zeros((L, B, H), jnp.float32)
    outs = []
    for t in range(S):
        inp = x[:, t, :]
        hs, cs = [], []
        for l in range(L):
            gates = inp @ params["w_ih"][l] + h[l] @ params["w_hh"][l] + params["b"][l]
            i = jax.nn.sigmoid(gates[:, :H])
            f = jax.nn.sigmoid(gates[:, H:2 * H])
            g = jnp.tanh(gates[:, 2 * H:3 * H])
            o = jax.nn.sigmoid(gates[:, 3 * H:])
            cn = f * c[l] + i * g
            hn = o * jnp.tanh(cn)
            hs.append(hn)
            cs.append(cn)
            inp = hn
        h = jnp.stack(hs)
        c = jnp.stack(cs)
        outs.append(inp @ params["w_v"] + params["b_v"])
    return jnp.stack(outs, axis=1)  # (B, S, 1)


if __name__ == "__main__":
    # args.state_dim=8, args.lstm_hidden_dim=32, args.lstm_num_layers=2
    batch, seq, state_dim, hidden_dim, num_layers = 2, 8, 8, 32, 2

    key = jax.random.PRNGKey(0)
    key, k_x, k_p = jax.random.split(key, 3)
    s = jax.random.normal(k_x, (batch, seq, state_dim), jnp.float32)
    params = init_params(k_p, state_dim, hidden_dim, num_layers)
    packed = pack_params(params)  # one-time weight prep, off the per-call path

    value = critic_lstm_forward(s, packed)
    value = jax.block_until_ready(value)

    ref = critic_lstm_reference(s, params)
    assert value.shape == (batch, seq, 1)
    assert jnp.allclose(value, ref, rtol=1e-5, atol=1e-5), "mismatch vs pure-JAX reference"

    print("KERNEL_OK")
</pallas_src>

<mosaic_0001>
module attributes {stable_mosaic.version = 11 : i64} {
  func.func @kernel(%arg0: memref<2x8x8xf32, #tpu.memory_space<vmem>>, %arg1: memref<40x128xf32, #tpu.memory_space<vmem>>, %arg2: memref<64x128xf32, #tpu.memory_space<vmem>>, %arg3: memref<1x128xf32, #tpu.memory_space<vmem>>, %arg4: memref<1x128xf32, #tpu.memory_space<vmem>>, %arg5: memref<32x1xf32, #tpu.memory_space<vmem>>, %arg6: memref<1x1xf32, #tpu.memory_space<vmem>>, %arg7: memref<2x8x1xf32, #tpu.memory_space<vmem>>) attributes {dimension_semantics = [], scalar_prefetch = 0 : i64, scratch_operands = 0 : i64, tpu.core_type = #tpu.core_type<tc>} {
    %c0 = arith.constant 0 : index
    %c0_0 = arith.constant 0 : index
    %c0_1 = arith.constant 0 : index
    %0 = vector.load %arg0[%c0, %c0_0, %c0_1] : memref<2x8x8xf32, #tpu.memory_space<vmem>>, vector<2x8x8xf32>
    %c0_2 = arith.constant 0 : index
    %c0_3 = arith.constant 0 : index
    %1 = vector.load %arg1[%c0_2, %c0_3] : memref<40x128xf32, #tpu.memory_space<vmem>>, vector<40x128xf32>
    %c0_4 = arith.constant 0 : index
    %c0_5 = arith.constant 0 : index
    %2 = vector.load %arg2[%c0_4, %c0_5] : memref<64x128xf32, #tpu.memory_space<vmem>>, vector<64x128xf32>
    %c0_6 = arith.constant 0 : index
    %c0_7 = arith.constant 0 : index
    %3 = vector.load %arg3[%c0_6, %c0_7] : memref<1x128xf32, #tpu.memory_space<vmem>>, vector<1x128xf32>
    %c0_8 = arith.constant 0 : index
    %c0_9 = arith.constant 0 : index
    %4 = vector.load %arg4[%c0_8, %c0_9] : memref<1x128xf32, #tpu.memory_space<vmem>>, vector<1x128xf32>
    %cst = arith.constant 0.000000e+00 : f32
    %5 = vector.broadcast %cst : f32 to vector<2x32xf32>
    %cst_10 = arith.constant 0.000000e+00 : f32
    %6 = vector.broadcast %cst_10 : f32 to vector<2x32xf32>
    %cst_11 = arith.constant 0.000000e+00 : f32
    %7 = vector.broadcast %cst_11 : f32 to vector<2x32xf32>
    %cst_12 = arith.constant 0.000000e+00 : f32
    %8 = vector.broadcast %cst_12 : f32 to vector<2x32xf32>
    %9 = vector.extract_strided_slice %0 {offsets = [0, 0, 0], sizes = [2, 1, 8], strides = [1, 1, 1]} : vector<2x8x8xf32> to vector<2x1x8xf32>
    %10 = vector.shape_cast %9 : vector<2x1x8xf32> to vector<2x8xf32>
    %11 = tpu.concatenate %10, %5 in 1 : vector<2x8xf32>, vector<2x32xf32> -> vector<2x40xf32>
    %cst_13 = arith.constant dense<0.000000e+00> : vector<2x128xf32>
    %12 = tpu.matmul %11, %1, %cst_13 {dimension_numbers = #tpu.dot_dimension_numbers<[1], [0], [0], [1], [0, 0, 1, 1], [], []>} : vector<2x40xf32>, vector<40x128xf32>, vector<2x128xf32> -> vector<2x128xf32>
    %13 = vector.broadcast %3 : vector<1x128xf32> to vector<2x128xf32>
    %14 = arith.addf %12, %13 : vector<2x128xf32>
    %15 = math.tanh %14 : vector<2x128xf32>
    %16 = vector.extract_strided_slice %15 {offsets = [0, 0], sizes = [2, 32], strides = [1, 1]} : vector<2x128xf32> to vector<2x32xf32>
    %cst_14 = arith.constant 5.000000e-01 : f32
    %17 = vector.broadcast %cst_14 : f32 to vector<2x32xf32>
    %18 = arith.mulf %17, %16 : vector<2x32xf32>
    %cst_15 = arith.constant 5.000000e-01 : f32
    %19 = vector.broadcast %cst_15 : f32 to vector<2x32xf32>
    %20 = arith.addf %18, %19 : vector<2x32xf32>
    %21 = vector.extract_strided_slice %15 {offsets = [0, 32], sizes = [2, 32], strides = [1, 1]} : vector<2x128xf32> to vector<2x32xf32>
    %cst_16 = arith.constant 5.000000e-01 : f32
    %22 = vector.broadcast %cst_16 : f32 to vector<2x32xf32>
    %23 = arith.mulf %22, %21 : vector<2x32xf32>
    %cst_17 = arith.constant 5.000000e-01 : f32
    %24 = vector.broadcast %cst_17 : f32 to vector<2x32xf32>
    %25 = arith.addf %23, %24 : vector<2x32xf32>
    %26 = vector.extract_strided_slice %15 {offsets = [0, 64], sizes = [2, 32], strides = [1, 1]} : vector<2x128xf32> to vector<2x32xf32>
    %27 = vector.extract_strided_slice %15 {offsets = [0, 96], sizes = [2, 32], strides = [1, 1]} : vector<2x128xf32> to vector<2x32xf32>
    %cst_18 = arith.constant 5.000000e-01 : f32
    %28 = vector.broadcast %cst_18 : f32 to vector<2x32xf32>
    %29 = arith.mulf %28, %27 : vector<2x32xf32>
    %cst_19 = arith.constant 5.000000e-01 : f32
    %30 = vector.broadcast %cst_19 : f32 to vector<2x32xf32>
    %31 = arith.addf %29, %30 : vector<2x32xf32>
    %32 = arith.mulf %25, %7 : vector<2x32xf32>
    %33 = arith.mulf %20, %26 : vector<2x32xf32>
    %34 = arith.addf %32, %33 : vector<2x32xf32>
    %35 = math.tanh %34 : vector<2x32xf32>
    %36 = arith.mulf %31, %35 : vector<2x32xf32>
    %37 = tpu.concatenate %36, %6 in 1 : vector<2x32xf32>, vector<2x32xf32> -> vector<2x64xf32>
    %cst_20 = arith.constant dense<0.000000e+00> : vector<2x128xf32>
    %38 = tpu.matmul %37, %2, %cst_20 {dimension_numbers = #tpu.dot_dimension_numbers<[1], [0], [0], [1], [0, 0, 1, 1], [], []>} : vector<2x64xf32>, vector<64x128xf32>, vector<2x128xf32> -> vector<2x128xf32>
    %39 = vector.broadcast %4 : vector<1x128xf32> to vector<2x128xf32>
    %40 = arith.addf %38, %39 : vector<2x128xf32>
    %41 = math.tanh %40 : vector<2x128xf32>
    %42 = vector.extract_strided_slice %41 {offsets = [0, 0], sizes = [2, 32], strides = [1, 1]} : vector<2x128xf32> to vector<2x32xf32>
    %cst_21 = arith.constant 5.000000e-01 : f32
    %43 = vector.broadcast %cst_21 : f32 to vector<2x32xf32>
    %44 = arith.mulf %43, %42 : vector<2x32xf32>
    %cst_22 = arith.constant 5.000000e-01 : f32
    %45 = vector.broadcast %cst_22 : f32 to vector<2x32xf32>
    %46 = arith.addf %44, %45 : vector<2x32xf32>
    %47 = vector.extract_strided_slice %41 {offsets = [0, 32], sizes = [2, 32], strides = [1, 1]} : vector<2x128xf32> to vector<2x32xf32>
    %cst_23 = arith.constant 5.000000e-01 : f32
    %48 = vector.broadcast %cst_23 : f32 to vector<2x32xf32>
    %49 = arith.mulf %48, %47 : vector<2x32xf32>
    %cst_24 = arith.constant 5.000000e-01 : f32
    %50 = vector.broadcast %cst_24 : f32 to vector<2x32xf32>
    %51 = arith.addf %49, %50 : vector<2x32xf32>
    %52 = vector.extract_strided_slice %41 {offsets = [0, 64], sizes = [2, 32], strides = [1, 1]} : vector<2x128xf32> to vector<2x32xf32>
    %53 = vector.extract_strided_slice %41 {offsets = [0, 96], sizes = [2, 32], strides = [1, 1]} : vector<2x128xf32> to vector<2x32xf32>
    %cst_25 = arith.constant 5.000000e-01 : f32
    %54 = vector.broadcast %cst_25 : f32 to vector<2x32xf32>
    %55 = arith.mulf %54, %53 : vector<2x32xf32>
    %cst_26 = arith.constant 5.000000e-01 : f32
    %56 = vector.broadcast %cst_26 : f32 to vector<2x32xf32>
    %57 = arith.addf %55, %56 : vector<2x32xf32>
    %58 = arith.mulf %51, %8 : vector<2x32xf32>
    %59 = arith.mulf %46, %52 : vector<2x32xf32>
    %60 = arith.addf %58, %59 : vector<2x32xf32>
    %61 = math.tanh %60 : vector<2x32xf32>
    %62 = arith.mulf %57, %61 : vector<2x32xf32>
    %63 = vector.extract_strided_slice %0 {offsets = [0, 1, 0], sizes = [2, 1, 8], strides = [1, 1, 1]} : vector<2x8x8xf32> to vector<2x1x8xf32>
    %64 = vector.shape_cast %63 : vector<2x1x8xf32> to vector<2x8xf32>
    %65 = tpu.concatenate %64, %36 in 1 : vector<2x8xf32>, vector<2x32xf32> -> vector<2x40xf32>
    %cst_27 = arith.constant dense<0.000000e+00> : vector<2x128xf32>
    %66 = tpu.matmul %65, %1, %cst_27 {dimension_numbers = #tpu.dot_dimension_numbers<[1], [0], [0], [1], [0, 0, 1, 1], [], []>} : vector<2x40xf32>, vector<40x128xf32>, vector<2x128xf32> -> vector<2x128xf32>
    %67 = vector.broadcast %3 : vector<1x128xf32> to vector<2x128xf32>
    %68 = arith.addf %66, %67 : vector<2x128xf32>
    %69 = math.tanh %68 : vector<2x128xf32>
    %70 = vector.extract_strided_slice %69 {offsets = [0, 0], sizes = [2, 32], strides = [1, 1]} : vector<2x128xf32> to vector<2x32xf32>
    %cst_28 = arith.constant 5.000000e-01 : f32
    %71 = vector.broadcast %cst_28 : f32 to vector<2x32xf32>
    %72 = arith.mulf %71, %70 : vector<2x32xf32>
    %cst_29 = arith.constant 5.000000e-01 : f32
    %73 = vector.broadcast %cst_29 : f32 to vector<2x32xf32>
    %74 = arith.addf %72, %73 : vector<2x32xf32>
    %75 = vector.extract_strided_slice %69 {offsets = [0, 32], sizes = [2, 32], strides = [1, 1]} : vector<2x128xf32> to vector<2x32xf32>
    %cst_30 = arith.constant 5.000000e-01 : f32
    %76 = vector.broadcast %cst_30 : f32 to vector<2x32xf32>
    %77 = arith.mulf %76, %75 : vector<2x32xf32>
    %cst_31 = arith.constant 5.000000e-01 : f32
    %78 = vector.broadcast %cst_31 : f32 to vector<2x32xf32>
    %79 = arith.addf %77, %78 : vector<2x32xf32>
    %80 = vector.extract_strided_slice %69 {offsets = [0, 64], sizes = [2, 32], strides = [1, 1]} : vector<2x128xf32> to vector<2x32xf32>
    %81 = vector.extract_strided_slice %69 {offsets = [0, 96], sizes = [2, 32], strides = [1, 1]} : vector<2x128xf32> to vector<2x32xf32>
    %cst_32 = arith.constant 5.000000e-01 : f32
    %82 = vector.broadcast %cst_32 : f32 to vector<2x32xf32>
    %83 = arith.mulf %82, %81 : vector<2x32xf32>
    %cst_33 = arith.constant 5.000000e-01 : f32
    %84 = vector.broadcast %cst_33 : f32 to vector<2x32xf32>
    %85 = arith.addf %83, %84 : vector<2x32xf32>
    %86 = arith.mulf %79, %34 : vector<2x32xf32>
    %87 = arith.mulf %74, %80 : vector<2x32xf32>
    %88 = arith.addf %86, %87 : vector<2x32xf32>
    %89 = math.tanh %88 : vector<2x32xf32>
    %90 = arith.mulf %85, %89 : vector<2x32xf32>
    %91 = tpu.concatenate %90, %62 in 1 : vector<2x32xf32>, vector<2x32xf32> -> vector<2x64xf32>
    %cst_34 = arith.constant dense<0.000000e+00> : vector<2x128xf32>
    %92 = tpu.matmul %91, %2, %cst_34 {dimension_numbers = #tpu.dot_dimension_numbers<[1], [0], [0], [1], [0, 0, 1, 1], [], []>} : vector<2x64xf32>, vector<64x128xf32>, vector<2x128xf32> -> vector<2x128xf32>
    %93 = vector.broadcast %4 : vector<1x128xf32> to vector<2x128xf32>
    %94 = arith.addf %92, %93 : vector<2x128xf32>
    %95 = math.tanh %94 : vector<2x128xf32>
    %96 = vector.extract_strided_slice %95 {offsets = [0, 0], sizes = [2, 32], strides = [1, 1]} : vector<2x128xf32> to vector<2x32xf32>
    %cst_35 = arith.constant 5.000000e-01 : f32
    %97 = vector.broadcast %cst_35 : f32 to vector<2x32xf32>
    %98 = arith.mulf %97, %96 : vector<2x32xf32>
    %cst_36 = arith.constant 5.000000e-01 : f32
    %99 = vector.broadcast %cst_36 : f32 to vector<2x32xf32>
    %100 = arith.addf %98, %99 : vector<2x32xf32>
    %101 = vector.extract_strided_slice %95 {offsets = [0, 32], sizes = [2, 32], strides = [1, 1]} : vector<2x128xf32> to vector<2x32xf32>
    %cst_37 = arith.constant 5.000000e-01 : f32
    %102 = vector.broadcast %cst_37 : f32 to vector<2x32xf32>
    %103 = arith.mulf %102, %101 : vector<2x32xf32>
    %cst_38 = arith.constant 5.000000e-01 : f32
    %104 = vector.broadcast %cst_38 : f32 to vector<2x32xf32>
    %105 = arith.addf %103, %104 : vector<2x32xf32>
    %106 = vector.extract_strided_slice %95 {offsets = [0, 64], sizes = [2, 32], strides = [1, 1]} : vector<2x128xf32> to vector<2x32xf32>
    %107 = vector.extract_strided_slice %95 {offsets = [0, 96], sizes = [2, 32], strides = [1, 1]} : vector<2x128xf32> to vector<2x32xf32>
    %cst_39 = arith.constant 5.000000e-01 : f32
    %108 = vector.broadcast %cst_39 : f32 to vector<2x32xf32>
    %109 = arith.mulf %108, %107 : vector<2x32xf32>
    %cst_40 = arith.constant 5.000000e-01 : f32
    %110 = vector.broadcast %cst_40 : f32 to vector<2x32xf32>
    %111 = arith.addf %109, %110 : vector<2x32xf32>
    %112 = arith.mulf %105, %60 : vector<2x32xf32>
    %113 = arith.mulf %100, %106 : vector<2x32xf32>
    %114 = arith.addf %112, %113 : vector<2x32xf32>
    %115 = math.tanh %114 : vector<2x32xf32>
    %116 = arith.mulf %111, %115 : vector<2x32xf32>
    %117 = vector.extract_strided_slice %0 {offsets = [0, 2, 0], sizes = [2, 1, 8], strides = [1, 1, 1]} : vector<2x8x8xf32> to vector<2x1x8xf32>
    %118 = vector.shape_cast %117 : vector<2x1x8xf32> to vector<2x8xf32>
    %119 = tpu.concatenate %118, %90 in 1 : vector<2x8xf32>, vector<2x32xf32> -> vector<2x40xf32>
    %cst_41 = arith.constant dense<0.000000e+00> : vector<2x128xf32>
    %120 = tpu.matmul %119, %1, %cst_41 {dimension_numbers = #tpu.dot_dimension_numbers<[1], [0], [0], [1], [0, 0, 1, 1], [], []>} : vector<2x40xf32>, vector<40x128xf32>, vector<2x128xf32> -> vector<2x128xf32>
    %121 = vector.broadcast %3 : vector<1x128xf32> to vector<2x128xf32>
    %122 = arith.addf %120, %121 : vector<2x128xf32>
    %123 = math.tanh %122 : vector<2x128xf32>
    %124 = vector.extract_strided_slice %123 {offsets = [0, 0], sizes = [2, 32], strides = [1, 1]} : vector<2x128xf32> to vector<2x32xf32>
    %cst_42 = arith.constant 5.000000e-01 : f32
    %125 = vector.broadcast %cst_42 : f32 to vector<2x32xf32>
    %126 = arith.mulf %125, %124 : vector<2x32xf32>
    %cst_43 = arith.constant 5.000000e-01 : f32
    %127 = vector.broadcast %cst_43 : f32 to vector<2x32xf32>
    %128 = arith.addf %126, %127 : vector<2x32xf32>
    %129 = vector.extract_strided_slice %123 {offsets = [0, 32], sizes = [2, 32], strides = [1, 1]} : vector<2x128xf32> to vector<2x32xf32>
    %cst_44 = arith.constant 5.000000e-01 : f32
    %130 = vector.broadcast %cst_44 : f32 to vector<2x32xf32>
    %131 = arith.mulf %130, %129 : vector<2x32xf32>
    %cst_45 = arith.constant 5.000000e-01 : f32
    %132 = vector.broadcast %cst_45 : f32 to vector<2x32xf32>
    %133 = arith.addf %131, %132 : vector<2x32xf32>
    %134 = vector.extract_strided_slice %123 {offsets = [0, 64], sizes = [2, 32], strides = [1, 1]} : vector<2x128xf32> to vector<2x32xf32>
    %135 = vector.extract_strided_slice %123 {offsets = [0, 96], sizes = [2, 32], strides = [1, 1]} : vector<2x128xf32> to vector<2x32xf32>
    %cst_46 = arith.constant 5.000000e-01 : f32
    %136 = vector.broadcast %cst_46 : f32 to vector<2x32xf32>
    %137 = arith.mulf %136, %135 : vector<2x32xf32>
    %cst_47 = arith.constant 5.000000e-01 : f32
    %138 = vector.broadcast %cst_47 : f32 to vector<2x32xf32>
    %139 = arith.addf %137, %138 : vector<2x32xf32>
    %140 = arith.mulf %133, %88 : vector<2x32xf32>
    %141 = arith.mulf %128, %134 : vector<2x32xf32>
    %142 = arith.addf %140, %141 : vector<2x32xf32>
    %143 = math.tanh %142 : vector<2x32xf32>
    %144 = arith.mulf %139, %143 : vector<2x32xf32>
    %145 = tpu.concatenate %144, %116 in 1 : vector<2x32xf32>, vector<2x32xf32> -> vector<2x64xf32>
    %cst_48 = arith.constant dense<0.000000e+00> : vector<2x128xf32>
    %146 = tpu.matmul %145, %2, %cst_48 {dimension_numbers = #tpu.dot_dimension_numbers<[1], [0], [0], [1], [0, 0, 1, 1], [], []>} : vector<2x64xf32>, vector<64x128xf32>, vector<2x128xf32> -> vector<2x128xf32>
    %147 = vector.broadcast %4 : vector<1x128xf32> to vector<2x128xf32>
    %148 = arith.addf %146, %147 : vector<2x128xf32>
    %149 = math.tanh %148 : vector<2x128xf32>
    %150 = vector.extract_strided_slice %149 {offsets = [0, 0], sizes = [2, 32], strides = [1, 1]} : vector<2x128xf32> to vector<2x32xf32>
    %cst_49 = arith.constant 5.000000e-01 : f32
    %151 = vector.broadcast %cst_49 : f32 to vector<2x32xf32>
    %152 = arith.mulf %151, %150 : vector<2x32xf32>
    %cst_50 = arith.constant 5.000000e-01 : f32
    %153 = vector.broadcast %cst_50 : f32 to vector<2x32xf32>
    %154 = arith.addf %152, %153 : vector<2x32xf32>
    %155 = vector.extract_strided_slice %149 {offsets = [0, 32], sizes = [2, 32], strides = [1, 1]} : vector<2x128xf32> to vector<2x32xf32>
    %cst_51 = arith.constant 5.000000e-01 : f32
    %156 = vector.broadcast %cst_51 : f32 to vector<2x32xf32>
    %157 = arith.mulf %156, %155 : vector<2x32xf32>
    %cst_52 = arith.constant 5.000000e-01 : f32
    %158 = vector.broadcast %cst_52 : f32 to vector<2x32xf32>
    %159 = arith.addf %157, %158 : vector<2x32xf32>
    %160 = vector.extract_strided_slice %149 {offsets = [0, 64], sizes = [2, 32], strides = [1, 1]} : vector<2x128xf32> to vector<2x32xf32>
    %161 = vector.extract_strided_slice %149 {offsets = [0, 96], sizes = [2, 32], strides = [1, 1]} : vector<2x128xf32> to vector<2x32xf32>
    %cst_53 = arith.constant 5.000000e-01 : f32
    %162 = vector.broadcast %cst_53 : f32 to vector<2x32xf32>
    %163 = arith.mulf %162, %161 : vector<2x32xf32>
    %cst_54 = arith.constant 5.000000e-01 : f32
    %164 = vector.broadcast %cst_54 : f32 to vector<2x32xf32>
    %165 = arith.addf %163, %164 : vector<2x32xf32>
    %166 = arith.mulf %159, %114 : vector<2x32xf32>
    %167 = arith.mulf %154, %160 : vector<2x32xf32>
    %168 = arith.addf %166, %167 : vector<2x32xf32>
    %169 = math.tanh %168 : vector<2x32xf32>
    %170 = arith.mulf %165, %169 : vector<2x32xf32>
    %171 = vector.extract_strided_slice %0 {offsets = [0, 3, 0], sizes = [2, 1, 8], strides = [1, 1, 1]} : vector<2x8x8xf32> to vector<2x1x8xf32>
    %172 = vector.shape_cast %171 : vector<2x1x8xf32> to vector<2x8xf32>
    %173 = tpu.concatenate %172, %144 in 1 : vector<2x8xf32>, vector<2x32xf32> -> vector<2x40xf32>
    %cst_55 = arith.constant dense<0.000000e+00> : vector<2x128xf32>
    %174 = tpu.matmul %173, %1, %cst_55 {dimension_numbers = #tpu.dot_dimension_numbers<[1], [0], [0], [1], [0, 0, 1, 1], [], []>} : vector<2x40xf32>, vector<40x128xf32>, vector<2x128xf32> -> vector<2x128xf32>
    %175 = vector.broadcast %3 : vector<1x128xf32> to vector<2x128xf32>
    %176 = arith.addf %174, %175 : vector<2x128xf32>
    %177 = math.tanh %176 : vector<2x128xf32>
    %178 = vector.extract_strided_slice %177 {offsets = [0, 0], sizes = [2, 32], strides = [1, 1]} : vector<2x128xf32> to vector<2x32xf32>
    %cst_56 = arith.constant 5.000000e-01 : f32
    %179 = vector.broadcast %cst_56 : f32 to vector<2x32xf32>
    %180 = arith.mulf %179, %178 : vector<2x32xf32>
    %cst_57 = arith.constant 5.000000e-01 : f32
    %181 = vector.broadcast %cst_57 : f32 to vector<2x32xf32>
    %182 = arith.addf %180, %181 : vector<2x32xf32>
    %183 = vector.extract_strided_slice %177 {offsets = [0, 32], sizes = [2, 32], strides = [1, 1]} : vector<2x128xf32> to vector<2x32xf32>
    %cst_58 = arith.constant 5.000000e-01 : f32
    %184 = vector.broadcast %cst_58 : f32 to vector<2x32xf32>
    %185 = arith.mulf %184, %183 : vector<2x32xf32>
    %cst_59 = arith.constant 5.000000e-01 : f32
    %186 = vector.broadcast %cst_59 : f32 to vector<2x32xf32>
    %187 = arith.addf %185, %186 : vector<2x32xf32>
    %188 = vector.extract_strided_slice %177 {offsets = [0, 64], sizes = [2, 32], strides = [1, 1]} : vector<2x128xf32> to vector<2x32xf32>
    %189 = vector.extract_strided_slice %177 {offsets = [0, 96], sizes = [2, 32], strides = [1, 1]} : vector<2x128xf32> to vector<2x32xf32>
    %cst_60 = arith.constant 5.000000e-01 : f32
    %190 = vector.broadcast %cst_60 : f32 to vector<2x32xf32>
    %191 = arith.mulf %190, %189 : vector<2x32xf32>
    %cst_61 = arith.constant 5.000000e-01 : f32
    %192 = vector.broadcast %cst_61 : f32 to vector<2x32xf32>
    %193 = arith.addf %191, %192 : vector<2x32xf32>
    %194 = arith.mulf %187, %142 : vector<2x32xf32>
    %195 = arith.mulf %182, %188 : vector<2x32xf32>
    %196 = arith.addf %194, %195 : vector<2x32xf32>
    %197 = math.tanh %196 : vector<2x32xf32>
    %198 = arith.mulf %193, %197 : vector<2x32xf32>
    %199 = tpu.concatenate %198, %170 in 1 : vector<2x32xf32>, vector<2x32xf32> -> vector<2x64xf32>
    %cst_62 = arith.constant dense<0.000000e+00> : vector<2x128xf32>
    %200 = tpu.matmul %199, %2, %cst_62 {dimension_numbers = #tpu.dot_dimension_numbers<[1], [0], [0], [1], [0, 0, 1, 1], [], []>} : vector<2x64xf32>, vector<64x128xf32>, vector<2x128xf32> -> vector<2x128xf32>
    %201 = vector.broadcast %4 : vector<1x128xf32> to vector<2x128xf32>
    %202 = arith.addf %200, %201 : vector<2x128xf32>
    %203 = math.tanh %202 : vector<2x128xf32>
    %204 = vector.extract_strided_slice %203 {offsets = [0, 0], sizes = [2, 32], strides = [1, 1]} : vector<2x128xf32> to vector<2x32xf32>
    %cst_63 = arith.constant 5.000000e-01 : f32
    %205 = vector.broadcast %cst_63 : f32 to vector<2x32xf32>
    %206 = arith.mulf %205, %204 : vector<2x32xf32>
    %cst_64 = arith.constant 5.000000e-01 : f32
    %207 = vector.broadcast %cst_64 : f32 to vector<2x32xf32>
    %208 = arith.addf %206, %207 : vector<2x32xf32>
    %209 = vector.extract_strided_slice %203 {offsets = [0, 32], sizes = [2, 32], strides = [1, 1]} : vector<2x128xf32> to vector<2x32xf32>
    %cst_65 = arith.constant 5.000000e-01 : f32
    %210 = vector.broadcast %cst_65 : f32 to vector<2x32xf32>
    %211 = arith.mulf %210, %209 : vector<2x32xf32>
    %cst_66 = arith.constant 5.000000e-01 : f32
    %212 = vector.broadcast %cst_66 : f32 to vector<2x32xf32>
    %213 = arith.addf %211, %212 : vector<2x32xf32>
    %214 = vector.extract_strided_slice %203 {offsets = [0, 64], sizes = [2, 32], strides = [1, 1]} : vector<2x128xf32> to vector<2x32xf32>
    %215 = vector.extract_strided_slice %203 {offsets = [0, 96], sizes = [2, 32], strides = [1, 1]} : vector<2x128xf32> to vector<2x32xf32>
    %cst_67 = arith.constant 5.000000e-01 : f32
    %216 = vector.broadcast %cst_67 : f32 to vector<2x32xf32>
    %217 = arith.mulf %216, %215 : vector<2x32xf32>
    %cst_68 = arith.constant 5.000000e-01 : f32
    %218 = vector.broadcast %cst_68 : f32 to vector<2x32xf32>
    %219 = arith.addf %217, %218 : vector<2x32xf32>
    %220 = arith.mulf %213, %168 : vector<2x32xf32>
    %221 = arith.mulf %208, %214 : vector<2x32xf32>
    %222 = arith.addf %220, %221 : vector<2x32xf32>
    %223 = math.tanh %222 : vector<2x32xf32>
    %224 = arith.mulf %219, %223 : vector<2x32xf32>
    %225 = vector.extract_strided_slice %0 {offsets = [0, 4, 0], sizes = [2, 1, 8], strides = [1, 1, 1]} : vector<2x8x8xf32> to vector<2x1x8xf32>
    %226 = vector.shape_cast %225 : vector<2x1x8xf32> to vector<2x8xf32>
    %227 = tpu.concatenate %226, %198 in 1 : vector<2x8xf32>, vector<2x32xf32> -> vector<2x40xf32>
    %cst_69 = arith.constant dense<0.000000e+00> : vector<2x128xf32>
    %228 = tpu.matmul %227, %1, %cst_69 {dimension_numbers = #tpu.dot_dimension_numbers<[1], [0], [0], [1], [0, 0, 1, 1], [], []>} : vector<2x40xf32>, vector<40x128xf32>, vector<2x128xf32> -> vector<2x128xf32>
    %229 = vector.broadcast %3 : vector<1x128xf32> to vector<2x128xf32>
    %230 = arith.addf %228, %229 : vector<2x128xf32>
    %231 = math.tanh %230 : vector<2x128xf32>
    %232 = vector.extract_strided_slice %231 {offsets = [0, 0], sizes = [2, 32], strides = [1, 1]} : vector<2x128xf32> to vector<2x32xf32>
    %cst_70 = arith.constant 5.000000e-01 : f32
    %233 = vector.broadcast %cst_70 : f32 to vector<2x32xf32>
    %234 = arith.mulf %233, %232 : vector<2x32xf32>
    %cst_71 = arith.constant 5.000000e-01 : f32
    %235 = vector.broadcast %cst_71 : f32 to vector<2x32xf32>
    %236 = arith.addf %234, %235 : vector<2x32xf32>
    %237 = vector.extract_strided_slice %231 {offsets = [0, 32], sizes = [2, 32], strides = [1, 1]} : vector<2x128xf32> to vector<2x32xf32>
    %cst_72 = arith.constant 5.000000e-01 : f32
    %238 = vector.broadcast %cst_72 : f32 to vector<2x32xf32>
    %239 = arith.mulf %238, %237 : vector<2x32xf32>
    %cst_73 = arith.constant 5.000000e-01 : f32
    %240 = vector.broadcast %cst_73 : f32 to vector<2x32xf32>
    %241 = arith.addf %239, %240 : vector<2x32xf32>
    %242 = vector.extract_strided_slice %231 {offsets = [0, 64], sizes = [2, 32], strides = [1, 1]} : vector<2x128xf32> to vector<2x32xf32>
    %243 = vector.extract_strided_slice %231 {offsets = [0, 96], sizes = [2, 32], strides = [1, 1]} : vector<2x128xf32> to vector<2x32xf32>
    %cst_74 = arith.constant 5.000000e-01 : f32
    %244 = vector.broadcast %cst_74 : f32 to vector<2x32xf32>
    %245 = arith.mulf %244, %243 : vector<2x32xf32>
    %cst_75 = arith.constant 5.000000e-01 : f32
    %246 = vector.broadcast %cst_75 : f32 to vector<2x32xf32>
    %247 = arith.addf %245, %246 : vector<2x32xf32>
    %248 = arith.mulf %241, %196 : vector<2x32xf32>
    %249 = arith.mulf %236, %242 : vector<2x32xf32>
    %250 = arith.addf %248, %249 : vector<2x32xf32>
    %251 = math.tanh %250 : vector<2x32xf32>
    %252 = arith.mulf %247, %251 : vector<2x32xf32>
    %253 = tpu.concatenate %252, %224 in 1 : vector<2x32xf32>, vector<2x32xf32> -> vector<2x64xf32>
    %cst_76 = arith.constant dense<0.000000e+00> : vector<2x128xf32>
    %254 = tpu.matmul %253, %2, %cst_76 {dimension_numbers = #tpu.dot_dimension_numbers<[1], [0], [0], [1], [0, 0, 1, 1], [], []>} : vector<2x64xf32>, vector<64x128xf32>, vector<2x128xf32> -> vector<2x128xf32>
    %255 = vector.broadcast %4 : vector<1x128xf32> to vector<2x128xf32>
    %256 = arith.addf %254, %255 : vector<2x128xf32>
    %257 = math.tanh %256 : vector<2x128xf32>
    %258 = vector.extract_strided_slice %257 {offsets = [0, 0], sizes = [2, 32], strides = [1, 1]} : vector<2x128xf32> to vector<2x32xf32>
    %cst_77 = arith.constant 5.000000e-01 : f32
    %259 = vector.broadcast %cst_77 : f32 to vector<2x32xf32>
    %260 = arith.mulf %259, %258 : vector<2x32xf32>
    %cst_78 = arith.constant 5.000000e-01 : f32
    %261 = vector.broadcast %cst_78 : f32 to vector<2x32xf32>
    %262 = arith.addf %260, %261 : vector<2x32xf32>
    %263 = vector.extract_strided_slice %257 {offsets = [0, 32], sizes = [2, 32], strides = [1, 1]} : vector<2x128xf32> to vector<2x32xf32>
    %cst_79 = arith.constant 5.000000e-01 : f32
    %264 = vector.broadcast %cst_79 : f32 to vector<2x32xf32>
    %265 = arith.mulf %264, %263 : vector<2x32xf32>
    %cst_80 = arith.constant 5.000000e-01 : f32
    %266 = vector.broadcast %cst_80 : f32 to vector<2x32xf32>
    %267 = arith.addf %265, %266 : vector<2x32xf32>
    %268 = vector.extract_strided_slice %257 {offsets = [0, 64], sizes = [2, 32], strides = [1, 1]} : vector<2x128xf32> to vector<2x32xf32>
    %269 = vector.extract_strided_slice %257 {offsets = [0, 96], sizes = [2, 32], strides = [1, 1]} : vector<2x128xf32> to vector<2x32xf32>
    %cst_81 = arith.constant 5.000000e-01 : f32
    %270 = vector.broadcast %cst_81 : f32 to vector<2x32xf32>
    %271 = arith.mulf %270, %269 : vector<2x32xf32>
    %cst_82 = arith.constant 5.000000e-01 : f32
    %272 = vector.broadcast %cst_82 : f32 to vector<2x32xf32>
    %273 = arith.addf %271, %272 : vector<2x32xf32>
    %274 = arith.mulf %267, %222 : vector<2x32xf32>
    %275 = arith.mulf %262, %268 : vector<2x32xf32>
    %276 = arith.addf %274, %275 : vector<2x32xf32>
    %277 = math.tanh %276 : vector<2x32xf32>
    %278 = arith.mulf %273, %277 : vector<2x32xf32>
    %279 = vector.extract_strided_slice %0 {offsets = [0, 5, 0], sizes = [2, 1, 8], strides = [1, 1, 1]} : vector<2x8x8xf32> to vector<2x1x8xf32>
    %280 = vector.shape_cast %279 : vector<2x1x8xf32> to vector<2x8xf32>
    %281 = tpu.concatenate %280, %252 in 1 : vector<2x8xf32>, vector<2x32xf32> -> vector<2x40xf32>
    %cst_83 = arith.constant dense<0.000000e+00> : vector<2x128xf32>
    %282 = tpu.matmul %281, %1, %cst_83 {dimension_numbers = #tpu.dot_dimension_numbers<[1], [0], [0], [1], [0, 0, 1, 1], [], []>} : vector<2x40xf32>, vector<40x128xf32>, vector<2x128xf32> -> vector<2x128xf32>
    %283 = vector.broadcast %3 : vector<1x128xf32> to vector<2x128xf32>
    %284 = arith.addf %282, %283 : vector<2x128xf32>
    %285 = math.tanh %284 : vector<2x128xf32>
    %286 = vector.extract_strided_slice %285 {offsets = [0, 0], sizes = [2, 32], strides = [1, 1]} : vector<2x128xf32> to vector<2x32xf32>
    %cst_84 = arith.constant 5.000000e-01 : f32
    %287 = vector.broadcast %cst_84 : f32 to vector<2x32xf32>
    %288 = arith.mulf %287, %286 : vector<2x32xf32>
    %cst_85 = arith.constant 5.000000e-01 : f32
    %289 = vector.broadcast %cst_85 : f32 to vector<2x32xf32>
    %290 = arith.addf %288, %289 : vector<2x32xf32>
    %291 = vector.extract_strided_slice %285 {offsets = [0, 32], sizes = [2, 32], strides = [1, 1]} : vector<2x128xf32> to vector<2x32xf32>
    %cst_86 = arith.constant 5.000000e-01 : f32
    %292 = vector.broadcast %cst_86 : f32 to vector<2x32xf32>
    %293 = arith.mulf %292, %291 : vector<2x32xf32>
    %cst_87 = arith.constant 5.000000e-01 : f32
    %294 = vector.broadcast %cst_87 : f32 to vector<2x32xf32>
    %295 = arith.addf %293, %294 : vector<2x32xf32>
    %296 = vector.extract_strided_slice %285 {offsets = [0, 64], sizes = [2, 32], strides = [1, 1]} : vector<2x128xf32> to vector<2x32xf32>
    %297 = vector.extract_strided_slice %285 {offsets = [0, 96], sizes = [2, 32], strides = [1, 1]} : vector<2x128xf32> to vector<2x32xf32>
    %cst_88 = arith.constant 5.000000e-01 : f32
    %298 = vector.broadcast %cst_88 : f32 to vector<2x32xf32>
    %299 = arith.mulf %298, %297 : vector<2x32xf32>
    %cst_89 = arith.constant 5.000000e-01 : f32
    %300 = vector.broadcast %cst_89 : f32 to vector<2x32xf32>
    %301 = arith.addf %299, %300 : vector<2x32xf32>
    %302 = arith.mulf %295, %250 : vector<2x32xf32>
    %303 = arith.mulf %290, %296 : vector<2x32xf32>
    %304 = arith.addf %302, %303 : vector<2x32xf32>
    %305 = math.tanh %304 : vector<2x32xf32>
    %306 = arith.mulf %301, %305 : vector<2x32xf32>
    %307 = tpu.concatenate %306, %278 in 1 : vector<2x32xf32>, vector<2x32xf32> -> vector<2x64xf32>
    %cst_90 = arith.constant dense<0.000000e+00> : vector<2x128xf32>
    %308 = tpu.matmul %307, %2, %cst_90 {dimension_numbers = #tpu.dot_dimension_numbers<[1], [0], [0], [1], [0, 0, 1, 1], [], []>} : vector<2x64xf32>, vector<64x128xf32>, vector<2x128xf32> -> vector<2x128xf32>
    %309 = vector.broadcast %4 : vector<1x128xf32> to vector<2x128xf32>
    %310 = arith.addf %308, %309 : vector<2x128xf32>
    %311 = math.tanh %310 : vector<2x128xf32>
    %312 = vector.extract_strided_slice %311 {offsets = [0, 0], sizes = [2, 32], strides = [1, 1]} : vector<2x128xf32> to vector<2x32xf32>
    %cst_91 = arith.constant 5.000000e-01 : f32
    %313 = vector.broadcast %cst_91 : f32 to vector<2x32xf32>
    %314 = arith.mulf %313, %312 : vector<2x32xf32>
    %cst_92 = arith.constant 5.000000e-01 : f32
    %315 = vector.broadcast %cst_92 : f32 to vector<2x32xf32>
    %316 = arith.addf %314, %315 : vector<2x32xf32>
    %317 = vector.extract_strided_slice %311 {offsets = [0, 32], sizes = [2, 32], strides = [1, 1]} : vector<2x128xf32> to vector<2x32xf32>
    %cst_93 = arith.constant 5.000000e-01 : f32
    %318 = vector.broadcast %cst_93 : f32 to vector<2x32xf32>
    %319 = arith.mulf %318, %317 : vector<2x32xf32>
    %cst_94 = arith.constant 5.000000e-01 : f32
    %320 = vector.broadcast %cst_94 : f32 to vector<2x32xf32>
    %321 = arith.addf %319, %320 : vector<2x32xf32>
    %322 = vector.extract_strided_slice %311 {offsets = [0, 64], sizes = [2, 32], strides = [1, 1]} : vector<2x128xf32> to vector<2x32xf32>
    %323 = vector.extract_strided_slice %311 {offsets = [0, 96], sizes = [2, 32], strides = [1, 1]} : vector<2x128xf32> to vector<2x32xf32>
    %cst_95 = arith.constant 5.000000e-01 : f32
    %324 = vector.broadcast %cst_95 : f32 to vector<2x32xf32>
    %325 = arith.mulf %324, %323 : vector<2x32xf32>
    %cst_96 = arith.constant 5.000000e-01 : f32
    %326 = vector.broadcast %cst_96 : f32 to vector<2x32xf32>
    %327 = arith.addf %325, %326 : vector<2x32xf32>
    %328 = arith.mulf %321, %276 : vector<2x32xf32>
    %329 = arith.mulf %316, %322 : vector<2x32xf32>
    %330 = arith.addf %328, %329 : vector<2x32xf32>
    %331 = math.tanh %330 : vector<2x32xf32>
    %332 = arith.mulf %327, %331 : vector<2x32xf32>
    %333 = vector.extract_strided_slice %0 {offsets = [0, 6, 0], sizes = [2, 1, 8], strides = [1, 1, 1]} : vector<2x8x8xf32> to vector<2x1x8xf32>
    %334 = vector.shape_cast %333 : vector<2x1x8xf32> to vector<2x8xf32>
    %335 = tpu.concatenate %334, %306 in 1 : vector<2x8xf32>, vector<2x32xf32> -> vector<2x40xf32>
    %cst_97 = arith.constant dense<0.000000e+00> : vector<2x128xf32>
    %336 = tpu.matmul %335, %1, %cst_97 {dimension_numbers = #tpu.dot_dimension_numbers<[1], [0], [0], [1], [0, 0, 1, 1], [], []>} : vector<2x40xf32>, vector<40x128xf32>, vector<2x128xf32> -> vector<2x128xf32>
    %337 = vector.broadcast %3 : vector<1x128xf32> to vector<2x128xf32>
    %338 = arith.addf %336, %337 : vector<2x128xf32>
    %339 = math.tanh %338 : vector<2x128xf32>
    %340 = vector.extract_strided_slice %339 {offsets = [0, 0], sizes = [2, 32], strides = [1, 1]} : vector<2x128xf32> to vector<2x32xf32>
    %cst_98 = arith.constant 5.000000e-01 : f32
    %341 = vector.broadcast %cst_98 : f32 to vector<2x32xf32>
    %342 = arith.mulf %341, %340 : vector<2x32xf32>
    %cst_99 = arith.constant 5.000000e-01 : f32
    %343 = vector.broadcast %cst_99 : f32 to vector<2x32xf32>
    %344 = arith.addf %342, %343 : vector<2x32xf32>
    %345 = vector.extract_strided_slice %339 {offsets = [0, 32], sizes = [2, 32], strides = [1, 1]} : vector<2x128xf32> to vector<2x32xf32>
    %cst_100 = arith.constant 5.000000e-01 : f32
    %346 = vector.broadcast %cst_100 : f32 to vector<2x32xf32>
    %347 = arith.mulf %346, %345 : vector<2x32xf32>
    %cst_101 = arith.constant 5.000000e-01 : f32
    %348 = vector.broadcast %cst_101 : f32 to vector<2x32xf32>
    %349 = arith.addf %347, %348 : vector<2x32xf32>
    %350 = vector.extract_strided_slice %339 {offsets = [0, 64], sizes = [2, 32], strides = [1, 1]} : vector<2x128xf32> to vector<2x32xf32>
    %351 = vector.extract_strided_slice %339 {offsets = [0, 96], sizes = [2, 32], strides = [1, 1]} : vector<2x128xf32> to vector<2x32xf32>
    %cst_102 = arith.constant 5.000000e-01 : f32
    %352 = vector.broadcast %cst_102 : f32 to vector<2x32xf32>
    %353 = arith.mulf %352, %351 : vector<2x32xf32>
    %cst_103 = arith.constant 5.000000e-01 : f32
    %354 = vector.broadcast %cst_103 : f32 to vector<2x32xf32>
    %355 = arith.addf %353, %354 : vector<2x32xf32>
    %356 = arith.mulf %349, %304 : vector<2x32xf32>
    %357 = arith.mulf %344, %350 : vector<2x32xf32>
    %358 = arith.addf %356, %357 : vector<2x32xf32>
    %359 = math.tanh %358 : vector<2x32xf32>
    %360 = arith.mulf %355, %359 : vector<2x32xf32>
    %361 = tpu.concatenate %360, %332 in 1 : vector<2x32xf32>, vector<2x32xf32> -> vector<2x64xf32>
    %cst_104 = arith.constant dense<0.000000e+00> : vector<2x128xf32>
    %362 = tpu.matmul %361, %2, %cst_104 {dimension_numbers = #tpu.dot_dimension_numbers<[1], [0], [0], [1], [0, 0, 1, 1], [], []>} : vector<2x64xf32>, vector<64x128xf32>, vector<2x128xf32> -> vector<2x128xf32>
    %363 = vector.broadcast %4 : vector<1x128xf32> to vector<2x128xf32>
    %364 = arith.addf %362, %363 : vector<2x128xf32>
    %365 = math.tanh %364 : vector<2x128xf32>
    %366 = vector.extract_strided_slice %365 {offsets = [0, 0], sizes = [2, 32], strides = [1, 1]} : vector<2x128xf32> to vector<2x32xf32>
    %cst_105 = arith.constant 5.000000e-01 : f32
    %367 = vector.broadcast %cst_105 : f32 to vector<2x32xf32>
    %368 = arith.mulf %367, %366 : vector<2x32xf32>
    %cst_106 = arith.constant 5.000000e-01 : f32
    %369 = vector.broadcast %cst_106 : f32 to vector<2x32xf32>
    %370 = arith.addf %368, %369 : vector<2x32xf32>
    %371 = vector.extract_strided_slice %365 {offsets = [0, 32], sizes = [2, 32], strides = [1, 1]} : vector<2x128xf32> to vector<2x32xf32>
    %cst_107 = arith.constant 5.000000e-01 : f32
    %372 = vector.broadcast %cst_107 : f32 to vector<2x32xf32>
    %373 = arith.mulf %372, %371 : vector<2x32xf32>
    %cst_108 = arith.constant 5.000000e-01 : f32
    %374 = vector.broadcast %cst_108 : f32 to vector<2x32xf32>
    %375 = arith.addf %373, %374 : vector<2x32xf32>
    %376 = vector.extract_strided_slice %365 {offsets = [0, 64], sizes = [2, 32], strides = [1, 1]} : vector<2x128xf32> to vector<2x32xf32>
    %377 = vector.extract_strided_slice %365 {offsets = [0, 96], sizes = [2, 32], strides = [1, 1]} : vector<2x128xf32> to vector<2x32xf32>
    %cst_109 = arith.constant 5.000000e-01 : f32
    %378 = vector.broadcast %cst_109 : f32 to vector<2x32xf32>
    %379 = arith.mulf %378, %377 : vector<2x32xf32>
    %cst_110 = arith.constant 5.000000e-01 : f32
    %380 = vector.broadcast %cst_110 : f32 to vector<2x32xf32>
    %381 = arith.addf %379, %380 : vector<2x32xf32>
    %382 = arith.mulf %375, %330 : vector<2x32xf32>
    %383 = arith.mulf %370, %376 : vector<2x32xf32>
    %384 = arith.addf %382, %383 : vector<2x32xf32>
    %385 = math.tanh %384 : vector<2x32xf32>
    %386 = arith.mulf %381, %385 : vector<2x32xf32>
    %387 = vector.extract_strided_slice %0 {offsets = [0, 7, 0], sizes = [2, 1, 8], strides = [1, 1, 1]} : vector<2x8x8xf32> to vector<2x1x8xf32>
    %388 = vector.shape_cast %387 : vector<2x1x8xf32> to vector<2x8xf32>
    %389 = tpu.concatenate %388, %360 in 1 : vector<2x8xf32>, vector<2x32xf32> -> vector<2x40xf32>
    %cst_111 = arith.constant dense<0.000000e+00> : vector<2x128xf32>
    %390 = tpu.matmul %389, %1, %cst_111 {dimension_numbers = #tpu.dot_dimension_numbers<[1], [0], [0], [1], [0, 0, 1, 1], [], []>} : vector<2x40xf32>, vector<40x128xf32>, vector<2x128xf32> -> vector<2x128xf32>
    %391 = vector.broadcast %3 : vector<1x128xf32> to vector<2x128xf32>
    %392 = arith.addf %390, %391 : vector<2x128xf32>
    %393 = math.tanh %392 : vector<2x128xf32>
    %394 = vector.extract_strided_slice %393 {offsets = [0, 0], sizes = [2, 32], strides = [1, 1]} : vector<2x128xf32> to vector<2x32xf32>
    %cst_112 = arith.constant 5.000000e-01 : f32
    %395 = vector.broadcast %cst_112 : f32 to vector<2x32xf32>
    %396 = arith.mulf %395, %394 : vector<2x32xf32>
    %cst_113 = arith.constant 5.000000e-01 : f32
    %397 = vector.broadcast %cst_113 : f32 to vector<2x32xf32>
    %398 = arith.addf %396, %397 : vector<2x32xf32>
    %399 = vector.extract_strided_slice %393 {offsets = [0, 32], sizes = [2, 32], strides = [1, 1]} : vector<2x128xf32> to vector<2x32xf32>
    %cst_114 = arith.constant 5.000000e-01 : f32
    %400 = vector.broadcast %cst_114 : f32 to vector<2x32xf32>
    %401 = arith.mulf %400, %399 : vector<2x32xf32>
    %cst_115 = arith.constant 5.000000e-01 : f32
    %402 = vector.broadcast %cst_115 : f32 to vector<2x32xf32>
    %403 = arith.addf %401, %402 : vector<2x32xf32>
    %404 = vector.extract_strided_slice %393 {offsets = [0, 64], sizes = [2, 32], strides = [1, 1]} : vector<2x128xf32> to vector<2x32xf32>
    %405 = vector.extract_strided_slice %393 {offsets = [0, 96], sizes = [2, 32], strides = [1, 1]} : vector<2x128xf32> to vector<2x32xf32>
    %cst_116 = arith.constant 5.000000e-01 : f32
    %406 = vector.broadcast %cst_116 : f32 to vector<2x32xf32>
    %407 = arith.mulf %406, %405 : vector<2x32xf32>
    %cst_117 = arith.constant 5.000000e-01 : f32
    %408 = vector.broadcast %cst_117 : f32 to vector<2x32xf32>
    %409 = arith.addf %407, %408 : vector<2x32xf32>
    %410 = arith.mulf %403, %358 : vector<2x32xf32>
    %411 = arith.mulf %398, %404 : vector<2x32xf32>
    %412 = arith.addf %410, %411 : vector<2x32xf32>
    %413 = math.tanh %412 : vector<2x32xf32>
    %414 = arith.mulf %409, %413 : vector<2x32xf32>
    %415 = tpu.concatenate %414, %386 in 1 : vector<2x32xf32>, vector<2x32xf32> -> vector<2x64xf32>
    %cst_118 = arith.constant dense<0.000000e+00> : vector<2x128xf32>
    %416 = tpu.matmul %415, %2, %cst_118 {dimension_numbers = #tpu.dot_dimension_numbers<[1], [0], [0], [1], [0, 0, 1, 1], [], []>} : vector<2x64xf32>, vector<64x128xf32>, vector<2x128xf32> -> vector<2x128xf32>
    %417 = vector.broadcast %4 : vector<1x128xf32> to vector<2x128xf32>
    %418 = arith.addf %416, %417 : vector<2x128xf32>
    %419 = math.tanh %418 : vector<2x128xf32>
    %420 = vector.extract_strided_slice %419 {offsets = [0, 0], sizes = [2, 32], strides = [1, 1]} : vector<2x128xf32> to vector<2x32xf32>
    %cst_119 = arith.constant 5.000000e-01 : f32
    %421 = vector.broadcast %cst_119 : f32 to vector<2x32xf32>
    %422 = arith.mulf %421, %420 : vector<2x32xf32>
    %cst_120 = arith.constant 5.000000e-01 : f32
    %423 = vector.broadcast %cst_120 : f32 to vector<2x32xf32>
    %424 = arith.addf %422, %423 : vector<2x32xf32>
    %425 = vector.extract_strided_slice %419 {offsets = [0, 32], sizes = [2, 32], strides = [1, 1]} : vector<2x128xf32> to vector<2x32xf32>
    %cst_121 = arith.constant 5.000000e-01 : f32
    %426 = vector.broadcast %cst_121 : f32 to vector<2x32xf32>
    %427 = arith.mulf %426, %425 : vector<2x32xf32>
    %cst_122 = arith.constant 5.000000e-01 : f32
    %428 = vector.broadcast %cst_122 : f32 to vector<2x32xf32>
    %429 = arith.addf %427, %428 : vector<2x32xf32>
    %430 = vector.extract_strided_slice %419 {offsets = [0, 64], sizes = [2, 32], strides = [1, 1]} : vector<2x128xf32> to vector<2x32xf32>
    %431 = vector.extract_strided_slice %419 {offsets = [0, 96], sizes = [2, 32], strides = [1, 1]} : vector<2x128xf32> to vector<2x32xf32>
    %cst_123 = arith.constant 5.000000e-01 : f32
    %432 = vector.broadcast %cst_123 : f32 to vector<2x32xf32>
    %433 = arith.mulf %432, %431 : vector<2x32xf32>
    %cst_124 = arith.constant 5.000000e-01 : f32
    %434 = vector.broadcast %cst_124 : f32 to vector<2x32xf32>
    %435 = arith.addf %433, %434 : vector<2x32xf32>
    %436 = arith.mulf %429, %384 : vector<2x32xf32>
    %437 = arith.mulf %424, %430 : vector<2x32xf32>
    %438 = arith.addf %436, %437 : vector<2x32xf32>
    %439 = math.tanh %438 : vector<2x32xf32>
    %440 = arith.mulf %435, %439 : vector<2x32xf32>
    %441 = vector.shape_cast %62 : vector<2x32xf32> to vector<2x1x32xf32>
    %442 = vector.shape_cast %116 : vector<2x32xf32> to vector<2x1x32xf32>
    %443 = vector.shape_cast %170 : vector<2x32xf32> to vector<2x1x32xf32>
    %444 = vector.shape_cast %224 : vector<2x32xf32> to vector<2x1x32xf32>
    %445 = vector.shape_cast %278 : vector<2x32xf32> to vector<2x1x32xf32>
    %446 = vector.shape_cast %332 : vector<2x32xf32> to vector<2x1x32xf32>
    %447 = vector.shape_cast %386 : vector<2x32xf32> to vector<2x1x32xf32>
    %448 = vector.shape_cast %440 : vector<2x32xf32> to vector<2x1x32xf32>
    %449 = tpu.concatenate %441, %442, %443, %444, %445, %446, %447, %448 in 1 : vector<2x1x32xf32>, vector<2x1x32xf32>, vector<2x1x32xf32>, vector<2x1x32xf32>, vector<2x1x32xf32>, vector<2x1x32xf32>, vector<2x1x32xf32>, vector<2x1x32xf32> -> vector<2x8x32xf32>
    %450 = vector.shape_cast %449 : vector<2x8x32xf32> to vector<16x32xf32>
    %c0_125 = arith.constant 0 : index
    %c0_126 = arith.constant 0 : index
    %451 = vector.load %arg5[%c0_125, %c0_126] : memref<32x1xf32, #tpu.memory_space<vmem>>, vector<32x1xf32>
    %cst_127 = arith.constant dense<0.000000e+00> : vector<16x1xf32>
    %452 = tpu.matmul %450, %451, %cst_127 {dimension_numbers = #tpu.dot_dimension_numbers<[1], [0], [0], [1], [0, 0, 1, 1], [], []>} : vector<16x32xf32>, vector<32x1xf32>, vector<16x1xf32> -> vector<16x1xf32>
    %c0_128 = arith.constant 0 : index
    %c0_129 = arith.constant 0 : index
    %453 = vector.load %arg6[%c0_128, %c0_129] : memref<1x1xf32, #tpu.memory_space<vmem>>, vector<1x1xf32>
    %454 = vector.broadcast %453 : vector<1x1xf32> to vector<16x1xf32>
    %455 = arith.addf %452, %454 : vector<16x1xf32>
    %456 = vector.shape_cast %455 : vector<16x1xf32> to vector<2x8x1xf32>
    %c0_130 = arith.constant 0 : index
    %c0_131 = arith.constant 0 : index
    %c0_132 = arith.constant 0 : index
    %457 = vector.load %arg7[%c0_130, %c0_131, %c0_132] : memref<2x8x1xf32, #tpu.memory_space<vmem>>, vector<2x8x1xf32>
    tpu.vector_store %arg7[%c0_130, %c0_131, %c0_132], %456 {strides = array<i32>} : memref<2x8x1xf32, #tpu.memory_space<vmem>>, vector<2x8x1xf32>,
    return
  }
}

</mosaic_0001>

<llo_original>
// kernel: tpu_custom_call.1
$region0: #{tpu_custom_call.1}
  #allocation0 [shape = 'u32[]', space=smem, size = 0x4, offset = 0x4, fixed_abs, tag = 'smem constant byte address 0x4 - core index']
  #allocation1 [shape = 'u32[72,128]{1,0:T(1,128)}', space=vmem, size = 0x9000, scoped, tag = 'internal scratch']
  #allocation2 [shape = 'f32[1,1]{1,0:T(1,128)S(1)}', space=vmem, size = 0x200, scoped, tag = 'scoped memory for tpu_custom_call.1']
  %s0 = inlined_call_operand.vmem [shape: f32[2,8,8], index: 0, kind: input, shape index: {}]
  %s1 = inlined_call_operand.hbm [shape: f32[40,128], index: 1, kind: input, shape index: {}]
  %s2 = inlined_call_operand.hbm [shape: f32[64,128], index: 2, kind: input, shape index: {}]
  %s3 = inlined_call_operand.vmem [shape: f32[1,128], index: 3, kind: input, shape index: {}]
  %s4 = inlined_call_operand.vmem [shape: f32[1,128], index: 4, kind: input, shape index: {}]
  %s5 = inlined_call_operand.vmem [shape: f32[32,1], index: 5, kind: input, shape index: {}]
  %s6 = inlined_call_operand.<no memory space> [shape: f32[1,1], index: 6, kind: input, shape index: {}]
  %s7 = inlined_call_operand.vmem [shape: f32[2,8,1], index: 7, kind: output, shape index: {}]
  %s8 = sld [smem:[#allocation0]]
  $region46: #{tpu_custom_call.1} parent=0
    _
  %s10 = ssub.s32 1, %s8
  %s11 = scalar_select 0, %s10, %s8
  %v12 = vstv %s6
  %13 = vst [vmem:[#allocation2] sm:$0x1] %v12
  $region1: #{tpu_custom_call.1} parent=0
    #allocation3 [shape = 'u8[20480]{0}', space=vmem, size = 0x5000, scoped, tag = 'input window, operand 1, single buffered']
    #allocation4 [shape = 's32[1]{0}', space=sflag, size = 0x4, scoped, tag = 'scoped memory for tpu_custom_call.1']
    #allocation5 [shape = 'u8[32768]{0}', space=vmem, size = 0x8000, scoped, tag = 'input window, operand 2, single buffered']
    #allocation6 [shape = 's32[1]{0}', space=sflag, size = 0x4, scoped, tag = 'scoped memory for tpu_custom_call.1']
    %14 = vsyncpa [#allocation4], 0
    %15 = vsyncpa [#allocation6], 0
    // Predicated region
    $region2: #{tpu_custom_call.1} parent=1 // pred_check
      _
    $region3: #{tpu_custom_call.1} parent=1 // pred_check_branch
      %17 = sbr.rel (0) target = $region5
    $region4: #{tpu_custom_call.1} parent=1 // pred_region
      _
    $region5: #{tpu_custom_call.1} parent=1 // pred_fallthru
      _
    // Predicated region
    $region6: #{tpu_custom_call.1} parent=1 // pred_check
      _
    $region7: #{tpu_custom_call.1} parent=1 // pred_check_branch
      %19 = sbr.rel (0) target = $region9
    $region8: #{tpu_custom_call.1} parent=1 // pred_region
      %21 = vsyncadd [#allocation4], 0
      %s22 = sshll.u32 %s1, 4
      %s23 = int_to_ptr.hbm [resolvable:$true] %s22
      %s24 = sshll.u32 [#allocation3], 4
      %s25 = int_to_ptr.vmem [resolvable:$true] %s24
      %30 = dma.hbm_to_vmem [thread:$0]  %s23, 640, %s25, [#allocation4], 128, 128, 8
    $region9: #{tpu_custom_call.1} parent=1 // pred_fallthru
      _
    // Predicated region
    $region10: #{tpu_custom_call.1} parent=1 // pred_check
      _
    $region11: #{tpu_custom_call.1} parent=1 // pred_check_branch
      %32 = sbr.rel (0) target = $region13
    $region12: #{tpu_custom_call.1} parent=1 // pred_region
      %34 = vsyncadd [#allocation6], 0
      %s35 = sshll.u32 %s2, 4
      %s36 = int_to_ptr.hbm [resolvable:$true] %s35
      %s37 = sshll.u32 [#allocation5], 4
      %s38 = int_to_ptr.vmem [resolvable:$true] %s37
      %43 = dma.hbm_to_vmem [thread:$0]  %s36, 1024, %s38, [#allocation6], 128, 128, 8
    $region13: #{tpu_custom_call.1} parent=1 // pred_fallthru
      _
    // Predicated region
    $region14: #{tpu_custom_call.1} parent=1 // pred_check
      _
    $region15: #{tpu_custom_call.1} parent=1 // pred_check_branch
      %45 = sbr.rel (0) target = $region17
    $region16: #{tpu_custom_call.1} parent=1 // pred_region
      _
    $region17: #{tpu_custom_call.1} parent=1 // pred_fallthru
      _
    // Predicated region
    $region18: #{tpu_custom_call.1} parent=1 // pred_check
      _
    $region19: #{tpu_custom_call.1} parent=1 // pred_check_branch
      %47 = sbr.rel (0) target = $region21
    $region20: #{tpu_custom_call.1} parent=1 // pred_region
      _
    $region21: #{tpu_custom_call.1} parent=1 // pred_fallthru
      _
    // Predicated region
    $region22: #{tpu_custom_call.1} parent=1 // pred_check
      _
    $region23: #{tpu_custom_call.1} parent=1 // pred_check_branch
      %49 = sbr.rel (0) target = $region25
    $region24: #{tpu_custom_call.1} parent=1 // pred_region
      _
    $region25: #{tpu_custom_call.1} parent=1 // pred_fallthru
      _
    // Predicated region
    $region26: #{tpu_custom_call.1} parent=1 // pred_check
      _
    $region27: #{tpu_custom_call.1} parent=1 // pred_check_branch
      %51 = sbr.rel (0) target = $region29
    $region28: #{tpu_custom_call.1} parent=1 // pred_region
      _
    $region29: #{tpu_custom_call.1} parent=1 // pred_fallthru
      _
    // Predicated region
    $region30: #{tpu_custom_call.1} parent=1 // pred_check
      _
    $region31: #{tpu_custom_call.1} parent=1 // pred_check_branch
      %53 = sbr.rel (0) target = $region33
    $region32: #{tpu_custom_call.1} parent=1 // pred_region
      %55 = dma.done [#allocation4], 640
    $region33: #{tpu_custom_call.1} parent=1 // pred_fallthru
      _
    // Predicated region
    $region34: #{tpu_custom_call.1} parent=1 // pred_check
      _
    $region35: #{tpu_custom_call.1} parent=1 // pred_check_branch
      %57 = sbr.rel (0) target = $region37
    $region36: #{tpu_custom_call.1} parent=1 // pred_region
      %59 = dma.done [#allocation6], 1024
    $region37: #{tpu_custom_call.1} parent=1 // pred_fallthru
      _
    %v60 = vld [vmem:[%s0] sm:$0xff]
    %v61 = vld [vmem:[%s0 + $0x8] sm:$0xff]
    %v62 = vld [vmem:[#allocation3] sm:$0xff]
    %v63 = vld [vmem:[#allocation3 + $0x8] sm:$0xff]
    %v64 = vld [vmem:[#allocation3 + $0x10] sm:$0xff]
    %v65 = vld [vmem:[#allocation3 + $0x18] sm:$0xff]
    %v66 = vld [vmem:[#allocation3 + $0x20] sm:$0xff]
    %v67 = vld [vmem:[#allocation5] sm:$0xff]
    %v68 = vld [vmem:[#allocation5 + $0x8] sm:$0xff]
    %v69 = vld [vmem:[#allocation5 + $0x10] sm:$0xff]
    %v70 = vld [vmem:[#allocation5 + $0x18] sm:$0xff]
    %v71 = vld [vmem:[#allocation5 + $0x20] sm:$0xff]
    %v72 = vld [vmem:[#allocation5 + $0x28] sm:$0xff]
    %v73 = vld [vmem:[#allocation5 + $0x30] sm:$0xff]
    %v74 = vld [vmem:[#allocation5 + $0x38] sm:$0xff]
    %v75 = vld [vmem:[%s3] sm:$0x1]
    %v76 = vld [vmem:[%s4] sm:$0x1]
    %v79 = vrot.slane %v61, 7
    %vm80 = vcmask 1041409
    %v81 = vsel %vm80, %v79, %v60
    %vm83 = vcmask 64512
    %v84 = vsel %vm83, %v81, 0.0
    %v86 = vperm.slane %v75, 0
    %vm88 = vcmask 326656
    %v90 = vsel %vm88, %v84, 0
    %92 = vmatpush.msra.mxu0 0.0
    %93 = vmatpush.msra.mxu0 0.0
    %94 = vmatpush.msra.mxu0 0.0
    %95 = vmatpush.msra.mxu0 0.0
    %96 = vmatpush.msra.mxu0 0.0
    %97 = vmatpush.msra.mxu0 0.0
    %98 = vmatpush.msra.mxu0 0.0
    %99 = vmatpush.msra.mxu0 0.0
    %100 = vmatpush.msra.mxu0 0.0
    %101 = vmatpush.msra.mxu0 0.0
    %102 = vmatpush.msra.mxu0 0.0
    %103 = vmatpush.msra.mxu0 %v66
    %104 = vmatpush.msra.mxu0 %v65
    %105 = vmatpush.msra.mxu0 %v64
    %106 = vmatpush.msra.mxu0 %v63
    %107 = vmatpush.msra.mxu0 %v62
    %108 = vmatmul.f32.gmra.mxu0 %v90
    %v109 = vpop.f32.mrf.mxu0
    %v110 = vadd.f32 %v86, %v109
    %111 = vdwg.mxu0
    %v112 = vtanh.pop %v110
    %v113 = vmul.f32 %v112, 0.5
    %v114 = vadd.f32 %v113, 0.5
    %v115 = vmul.f32 %v114, 0.0
    %117 = vrot.lane.b32.xlu0 %v112, 64
    %v118 = vpop.permute.xlu0 %117
    %v120 = vmul.f32 %v114, %v118
    %122 = vrot.lane.b32.xlu0 %v120, 32
    %v123 = vpop.permute.xlu0 %122
    %v125 = vadd.f32 %v115, %v123
    %v126 = vtanh.pop %v125
    %128 = vrot.lane.b32.xlu0 %v126, 64
    %v129 = vpop.permute.xlu0 %128
    %v131 = vmul.f32 %v114, %v129
    %133 = vrot.lane.b32.xlu0 %v131, 32
    %v134 = vpop.permute.xlu0 %133
    %vm136 = vcmask 261120
    %v137 = vsel %vm136, %v134, 0.0
    %v139 = vperm.slane %v76, 0
    %vm141 = vcmask 523264
    %v143 = vsel %vm141, %v137, 0
    %145 = vmatpush.msra.mxu0 0.0
    %146 = vmatpush.msra.mxu0 0.0
    %147 = vmatpush.msra.mxu0 0.0
    %148 = vmatpush.msra.mxu0 0.0
    %149 = vmatpush.msra.mxu0 0.0
    %150 = vmatpush.msra.mxu0 0.0
    %151 = vmatpush.msra.mxu0 0.0
    %152 = vmatpush.msra.mxu0 0.0
    %153 = vmatpush.msra.mxu0 %v74
    %154 = vmatpush.msra.mxu0 %v73
    %155 = vmatpush.msra.mxu0 %v72
    %156 = vmatpush.msra.mxu0 %v71
    %157 = vmatpush.msra.mxu0 %v70
    %158 = vmatpush.msra.mxu0 %v69
    %159 = vmatpush.msra.mxu0 %v68
    %160 = vmatpush.msra.mxu0 %v67
    %161 = vmatmul.f32.gmra.mxu0 %v143
    %v162 = vpop.f32.mrf.mxu0
    %v163 = vadd.f32 %v139, %v162
    %164 = vdwg.mxu0
    %v165 = vtanh.pop %v163
    %v166 = vmul.f32 %v165, 0.5
    %v167 = vadd.f32 %v166, 0.5
    %v168 = vmul.f32 %v167, 0.0
    %170 = vrot.lane.b32.xlu0 %v165, 64
    %v171 = vpop.permute.xlu0 %170
    %v173 = vmul.f32 %v167, %v171
    %175 = vrot.lane.b32.xlu0 %v173, 32
    %v176 = vpop.permute.xlu0 %175
    %v178 = vadd.f32 %v168, %v176
    %v179 = vtanh.pop %v178
    %181 = vrot.lane.b32.xlu0 %v179, 64
    %v182 = vpop.permute.xlu0 %181
    %v184 = vmul.f32 %v167, %v182
    %vm185 = vcmask 1042434
    %v186 = vsel %vm185, %v79, %v60
    %v188 = vrot.slane %v131, 7
    %189 = vrot.lane.b32.xlu0 %v188, 40
    %v190 = vpop.permute.xlu0 %189
    %v192 = vsel %vm83, %v186, %v190
    %v194 = vrot.slane %v192, 1
    %v195 = vsel %vm88, %v194, 0
    %197 = vmatpush.msra.mxu0 0.0
    %198 = vmatpush.msra.mxu0 0.0
    %199 = vmatpush.msra.mxu0 0.0
    %200 = vmatpush.msra.mxu0 0.0
    %201 = vmatpush.msra.mxu0 0.0
    %202 = vmatpush.msra.mxu0 0.0
    %203 = vmatpush.msra.mxu0 0.0
    %204 = vmatpush.msra.mxu0 0.0
    %205 = vmatpush.msra.mxu0 0.0
    %206 = vmatpush.msra.mxu0 0.0
    %207 = vmatpush.msra.mxu0 0.0
    %208 = vmatpush.msra.mxu0 %v66
    %209 = vmatpush.msra.mxu0 %v65
    %210 = vmatpush.msra.mxu0 %v64
    %211 = vmatpush.msra.mxu0 %v63
    %212 = vmatpush.msra.mxu0 %v62
    %213 = vmatmul.f32.gmra.mxu0 %v195
    %v214 = vpop.f32.mrf.mxu0
    %v215 = vadd.f32 %v86, %v214
    %216 = vdwg.mxu0
    %v217 = vtanh.pop %v215
    %v218 = vmul.f32 %v217, 0.5
    %v219 = vadd.f32 %v218, 0.5
    %v220 = vmul.f32 %v219, %v125
    %222 = vrot.lane.b32.xlu0 %v217, 64
    %v223 = vpop.permute.xlu0 %222
    %v225 = vmul.f32 %v219, %v223
    %227 = vrot.lane.b32.xlu0 %v225, 32
    %v228 = vpop.permute.xlu0 %227
    %v230 = vadd.f32 %v220, %v228
    %v231 = vtanh.pop %v230
    %233 = vrot.lane.b32.xlu0 %v231, 64
    %v234 = vpop.permute.xlu0 %233
    %v236 = vmul.f32 %v219, %v234
    %238 = vrot.lane.b32.xlu0 %v236, 32
    %v239 = vpop.permute.xlu0 %238
    %242 = vrot.lane.b32.xlu0 %v184, 64
    %v243 = vpop.permute.xlu0 %242
    %v245 = vsel %vm136, %v239, %v243
    %v247 = vsel %vm141, %v245, 0
    %249 = vmatpush.msra.mxu0 0.0
    %250 = vmatpush.msra.mxu0 0.0
    %251 = vmatpush.msra.mxu0 0.0
    %252 = vmatpush.msra.mxu0 0.0
    %253 = vmatpush.msra.mxu0 0.0
    %254 = vmatpush.msra.mxu0 0.0
    %255 = vmatpush.msra.mxu0 0.0
    %256 = vmatpush.msra.mxu0 0.0
    %257 = vmatpush.msra.mxu0 %v74
    %258 = vmatpush.msra.mxu0 %v73
    %259 = vmatpush.msra.mxu0 %v72
    %260 = vmatpush.msra.mxu0 %v71
    %261 = vmatpush.msra.mxu0 %v70
    %262 = vmatpush.msra.mxu0 %v69
    %263 = vmatpush.msra.mxu0 %v68
    %264 = vmatpush.msra.mxu0 %v67
    %265 = vmatmul.f32.gmra.mxu0 %v247
    %v266 = vpop.f32.mrf.mxu0
    %v267 = vadd.f32 %v139, %v266
    %268 = vdwg.mxu0
    %v269 = vtanh.pop %v267
    %v270 = vmul.f32 %v269, 0.5
    %v271 = vadd.f32 %v270, 0.5
    %v272 = vmul.f32 %v271, %v178
    %274 = vrot.lane.b32.xlu0 %v269, 64
    %v275 = vpop.permute.xlu0 %274
    %v277 = vmul.f32 %v271, %v275
    %279 = vrot.lane.b32.xlu0 %v277, 32
    %v280 = vpop.permute.xlu0 %279
    %v282 = vadd.f32 %v272, %v280
    %v283 = vtanh.pop %v282
    %285 = vrot.lane.b32.xlu0 %v283, 64
    %v286 = vpop.permute.xlu0 %285
    %v288 = vmul.f32 %v271, %v286
    %vm289 = vcmask 1043459
    %v290 = vsel %vm289, %v79, %v60
    %v292 = vrot.slane %v236, 6
    %293 = vrot.lane.b32.xlu0 %v292, 40
    %v294 = vpop.permute.xlu0 %293
    %v296 = vsel %vm83, %v290, %v294
    %v298 = vrot.slane %v296, 2
    %v299 = vsel %vm88, %v298, 0
    %301 = vmatpush.msra.mxu0 0.0
    %302 = vmatpush.msra.mxu0 0.0
    %303 = vmatpush.msra.mxu0 0.0
    %304 = vmatpush.msra.mxu0 0.0
    %305 = vmatpush.msra.mxu0 0.0
    %306 = vmatpush.msra.mxu0 0.0
    %307 = vmatpush.msra.mxu0 0.0
    %308 = vmatpush.msra.mxu0 0.0
    %309 = vmatpush.msra.mxu0 0.0
    %310 = vmatpush.msra.mxu0 0.0
    %311 = vmatpush.msra.mxu0 0.0
    %312 = vmatpush.msra.mxu0 %v66
    %313 = vmatpush.msra.mxu0 %v65
    %314 = vmatpush.msra.mxu0 %v64
    %315 = vmatpush.msra.mxu0 %v63
    %316 = vmatpush.msra.mxu0 %v62
    %317 = vmatmul.f32.gmra.mxu0 %v299
    %v318 = vpop.f32.mrf.mxu0
    %v319 = vadd.f32 %v86, %v318
    %320 = vdwg.mxu0
    %v321 = vtanh.pop %v319
    %v322 = vmul.f32 %v321, 0.5
    %v323 = vadd.f32 %v322, 0.5
    %v324 = vmul.f32 %v323, %v230
    %326 = vrot.lane.b32.xlu0 %v321, 64
    %v327 = vpop.permute.xlu0 %326
    %v329 = vmul.f32 %v323, %v327
    %331 = vrot.lane.b32.xlu0 %v329, 32
    %v332 = vpop.permute.xlu0 %331
    %v334 = vadd.f32 %v324, %v332
    %v335 = vtanh.pop %v334
    %337 = vrot.lane.b32.xlu0 %v335, 64
    %v338 = vpop.permute.xlu0 %337
    %v340 = vmul.f32 %v323, %v338
    %342 = vrot.lane.b32.xlu0 %v340, 32
    %v343 = vpop.permute.xlu0 %342
    %346 = vrot.lane.b32.xlu0 %v288, 64
    %v347 = vpop.permute.xlu0 %346
    %v349 = vsel %vm136, %v343, %v347
    %v351 = vsel %vm141, %v349, 0
    %353 = vmatpush.msra.mxu0 0.0
    %354 = vmatpush.msra.mxu0 0.0
    %355 = vmatpush.msra.mxu0 0.0
    %356 = vmatpush.msra.mxu0 0.0
    %357 = vmatpush.msra.mxu0 0.0
    %358 = vmatpush.msra.mxu0 0.0
    %359 = vmatpush.msra.mxu0 0.0
    %360 = vmatpush.msra.mxu0 0.0
    %361 = vmatpush.msra.mxu0 %v74
    %362 = vmatpush.msra.mxu0 %v73
    %363 = vmatpush.msra.mxu0 %v72
    %364 = vmatpush.msra.mxu0 %v71
    %365 = vmatpush.msra.mxu0 %v70
    %366 = vmatpush.msra.mxu0 %v69
    %367 = vmatpush.msra.mxu0 %v68
    %368 = vmatpush.msra.mxu0 %v67
    %369 = vmatmul.f32.gmra.mxu0 %v351
    %v370 = vpop.f32.mrf.mxu0
    %v371 = vadd.f32 %v139, %v370
    %372 = vdwg.mxu0
    %v373 = vtanh.pop %v371
    %v374 = vmul.f32 %v373, 0.5
    %v375 = vadd.f32 %v374, 0.5
    %v376 = vmul.f32 %v375, %v282
    %378 = vrot.lane.b32.xlu0 %v373, 64
    %v379 = vpop.permute.xlu0 %378
    %v381 = vmul.f32 %v375, %v379
    %383 = vrot.lane.b32.xlu0 %v381, 32
    %v384 = vpop.permute.xlu0 %383
    %v386 = vadd.f32 %v376, %v384
    %v387 = vtanh.pop %v386
    %389 = vrot.lane.b32.xlu0 %v387, 64
    %v390 = vpop.permute.xlu0 %389
    %v392 = vmul.f32 %v375, %v390
    %vm393 = vcmask 1044484
    %v394 = vsel %vm393, %v79, %v60
    %v396 = vrot.slane %v340, 5
    %397 = vrot.lane.b32.xlu0 %v396, 40
    %v398 = vpop.permute.xlu0 %397
    %v400 = vsel %vm83, %v394, %v398
    %v402 = vrot.slane %v400, 3
    %v403 = vsel %vm88, %v402, 0
    %405 = vmatpush.msra.mxu0 0.0
    %406 = vmatpush.msra.mxu0 0.0
    %407 = vmatpush.msra.mxu0 0.0
    %408 = vmatpush.msra.mxu0 0.0
    %409 = vmatpush.msra.mxu0 0.0
    %410 = vmatpush.msra.mxu0 0.0
    %411 = vmatpush.msra.mxu0 0.0
    %412 = vmatpush.msra.mxu0 0.0
    %413 = vmatpush.msra.mxu0 0.0
    %414 = vmatpush.msra.mxu0 0.0
    %415 = vmatpush.msra.mxu0 0.0
    %416 = vmatpush.msra.mxu0 %v66
    %417 = vmatpush.msra.mxu0 %v65
    %418 = vmatpush.msra.mxu0 %v64
    %419 = vmatpush.msra.mxu0 %v63
    %420 = vmatpush.msra.mxu0 %v62
    %421 = vmatmul.f32.gmra.mxu0 %v403
    %v422 = vpop.f32.mrf.mxu0
    %v423 = vadd.f32 %v86, %v422
    %424 = vdwg.mxu0
    %v425 = vtanh.pop %v423
    %v426 = vmul.f32 %v425, 0.5
    %v427 = vadd.f32 %v426, 0.5
    %v428 = vmul.f32 %v427, %v334
    %430 = vrot.lane.b32.xlu0 %v425, 64
    %v431 = vpop.permute.xlu0 %430
    %v433 = vmul.f32 %v427, %v431
    %435 = vrot.lane.b32.xlu0 %v433, 32
    %v436 = vpop.permute.xlu0 %435
    %v438 = vadd.f32 %v428, %v436
    %v439 = vtanh.pop %v438
    %441 = vrot.lane.b32.xlu0 %v439, 64
    %v442 = vpop.permute.xlu0 %441
    %v444 = vmul.f32 %v427, %v442
    %446 = vrot.lane.b32.xlu0 %v444, 32
    %v447 = vpop.permute.xlu0 %446
    %450 = vrot.lane.b32.xlu0 %v392, 64
    %v451 = vpop.permute.xlu0 %450
    %v453 = vsel %vm136, %v447, %v451
    %v455 = vsel %vm141, %v453, 0
    %457 = vmatpush.msra.mxu0 0.0
    %458 = vmatpush.msra.mxu0 0.0
    %459 = vmatpush.msra.mxu0 0.0
    %460 = vmatpush.msra.mxu0 0.0
    %461 = vmatpush.msra.mxu0 0.0
    %462 = vmatpush.msra.mxu0 0.0
    %463 = vmatpush.msra.mxu0 0.0
    %464 = vmatpush.msra.mxu0 0.0
    %465 = vmatpush.msra.mxu0 %v74
    %466 = vmatpush.msra.mxu0 %v73
    %467 = vmatpush.msra.mxu0 %v72
    %468 = vmatpush.msra.mxu0 %v71
    %469 = vmatpush.msra.mxu0 %v70
    %470 = vmatpush.msra.mxu0 %v69
    %471 = vmatpush.msra.mxu0 %v68
    %472 = vmatpush.msra.mxu0 %v67
    %473 = vmatmul.f32.gmra.mxu0 %v455
    %v474 = vpop.f32.mrf.mxu0
    %v475 = vadd.f32 %v139, %v474
    %476 = vdwg.mxu0
    %v477 = vtanh.pop %v475
    %v478 = vmul.f32 %v477, 0.5
    %v479 = vadd.f32 %v478, 0.5
    %v480 = vmul.f32 %v479, %v386
    %482 = vrot.lane.b32.xlu0 %v477, 64
    %v483 = vpop.permute.xlu0 %482
    %v485 = vmul.f32 %v479, %v483
    %487 = vrot.lane.b32.xlu0 %v485, 32
    %v488 = vpop.permute.xlu0 %487
    %v490 = vadd.f32 %v480, %v488
    %v491 = vtanh.pop %v490
    %493 = vrot.lane.b32.xlu0 %v491, 64
    %v494 = vpop.permute.xlu0 %493
    %v496 = vmul.f32 %v479, %v494
    %vm497 = vcmask 1045509
    %v498 = vsel %vm497, %v79, %v60
    %v500 = vrot.slane %v444, 4
    %501 = vrot.lane.b32.xlu0 %v500, 40
    %v502 = vpop.permute.xlu0 %501
    %v504 = vsel %vm83, %v498, %v502
    %v506 = vrot.slane %v504, 4
    %v507 = vsel %vm88, %v506, 0
    %509 = vmatpush.msra.mxu0 0.0
    %510 = vmatpush.msra.mxu0 0.0
    %511 = vmatpush.msra.mxu0 0.0
    %512 = vmatpush.msra.mxu0 0.0
    %513 = vmatpush.msra.mxu0 0.0
    %514 = vmatpush.msra.mxu0 0.0
    %515 = vmatpush.msra.mxu0 0.0
    %516 = vmatpush.msra.mxu0 0.0
    %517 = vmatpush.msra.mxu0 0.0
    %518 = vmatpush.msra.mxu0 0.0
    %519 = vmatpush.msra.mxu0 0.0
    %520 = vmatpush.msra.mxu0 %v66
    %521 = vmatpush.msra.mxu0 %v65
    %522 = vmatpush.msra.mxu0 %v64
    %523 = vmatpush.msra.mxu0 %v63
    %524 = vmatpush.msra.mxu0 %v62
    %525 = vmatmul.f32.gmra.mxu0 %v507
    %v526 = vpop.f32.mrf.mxu0
    %v527 = vadd.f32 %v86, %v526
    %528 = vdwg.mxu0
    %v529 = vtanh.pop %v527
    %v530 = vmul.f32 %v529, 0.5
    %v531 = vadd.f32 %v530, 0.5
    %v532 = vmul.f32 %v531, %v438
    %534 = vrot.lane.b32.xlu0 %v529, 64
    %v535 = vpop.permute.xlu0 %534
    %v537 = vmul.f32 %v531, %v535
    %539 = vrot.lane.b32.xlu0 %v537, 32
    %v540 = vpop.permute.xlu0 %539
    %v542 = vadd.f32 %v532, %v540
    %v543 = vtanh.pop %v542
    %545 = vrot.lane.b32.xlu0 %v543, 64
    %v546 = vpop.permute.xlu0 %545
    %v548 = vmul.f32 %v531, %v546
    %550 = vrot.lane.b32.xlu0 %v548, 32
    %v551 = vpop.permute.xlu0 %550
    %554 = vrot.lane.b32.xlu0 %v496, 64
    %v555 = vpop.permute.xlu0 %554
    %v557 = vsel %vm136, %v551, %v555
    %v559 = vsel %vm141, %v557, 0
    %561 = vmatpush.msra.mxu0 0.0
    %562 = vmatpush.msra.mxu0 0.0
    %563 = vmatpush.msra.mxu0 0.0
    %564 = vmatpush.msra.mxu0 0.0
    %565 = vmatpush.msra.mxu0 0.0
    %566 = vmatpush.msra.mxu0 0.0
    %567 = vmatpush.msra.mxu0 0.0
    %568 = vmatpush.msra.mxu0 0.0
    %569 = vmatpush.msra.mxu0 %v74
    %570 = vmatpush.msra.mxu0 %v73
    %571 = vmatpush.msra.mxu0 %v72
    %572 = vmatpush.msra.mxu0 %v71
    %573 = vmatpush.msra.mxu0 %v70
    %574 = vmatpush.msra.mxu0 %v69
    %575 = vmatpush.msra.mxu0 %v68
    %576 = vmatpush.msra.mxu0 %v67
    %577 = vmatmul.f32.gmra.mxu0 %v559
    %v578 = vpop.f32.mrf.mxu0
    %v579 = vadd.f32 %v139, %v578
    %580 = vdwg.mxu0
    %v581 = vtanh.pop %v579
    %v582 = vmul.f32 %v581, 0.5
    %v583 = vadd.f32 %v582, 0.5
    %v584 = vmul.f32 %v583, %v490
    %586 = vrot.lane.b32.xlu0 %v581, 64
    %v587 = vpop.permute.xlu0 %586
    %v589 = vmul.f32 %v583, %v587
    %591 = vrot.lane.b32.xlu0 %v589, 32
    %v592 = vpop.permute.xlu0 %591
    %v594 = vadd.f32 %v584, %v592
    %v595 = vtanh.pop %v594
    %597 = vrot.lane.b32.xlu0 %v595, 64
    %v598 = vpop.permute.xlu0 %597
    %v600 = vmul.f32 %v583, %v598
    %vm601 = vcmask 1046534
    %v602 = vsel %vm601, %v79, %v60
    %v604 = vrot.slane %v548, 3
    %605 = vrot.lane.b32.xlu0 %v604, 40
    %v606 = vpop.permute.xlu0 %605
    %v608 = vsel %vm83, %v602, %v606
    %v610 = vrot.slane %v608, 5
    %v611 = vsel %vm88, %v610, 0
    %613 = vmatpush.msra.mxu0 0.0
    %614 = vmatpush.msra.mxu0 0.0
    %615 = vmatpush.msra.mxu0 0.0
    %616 = vmatpush.msra.mxu0 0.0
    %617 = vmatpush.msra.mxu0 0.0
    %618 = vmatpush.msra.mxu0 0.0
    %619 = vmatpush.msra.mxu0 0.0
    %620 = vmatpush.msra.mxu0 0.0
    %621 = vmatpush.msra.mxu0 0.0
    %622 = vmatpush.msra.mxu0 0.0
    %623 = vmatpush.msra.mxu0 0.0
    %624 = vmatpush.msra.mxu0 %v66
    %625 = vmatpush.msra.mxu0 %v65
    %626 = vmatpush.msra.mxu0 %v64
    %627 = vmatpush.msra.mxu0 %v63
    %628 = vmatpush.msra.mxu0 %v62
    %629 = vmatmul.f32.gmra.mxu0 %v611
    %v630 = vpop.f32.mrf.mxu0
    %v631 = vadd.f32 %v86, %v630
    %632 = vdwg.mxu0
    %v633 = vtanh.pop %v631
    %v634 = vmul.f32 %v633, 0.5
    %v635 = vadd.f32 %v634, 0.5
    %v636 = vmul.f32 %v635, %v542
    %638 = vrot.lane.b32.xlu0 %v633, 64
    %v639 = vpop.permute.xlu0 %638
    %v641 = vmul.f32 %v635, %v639
    %643 = vrot.lane.b32.xlu0 %v641, 32
    %v644 = vpop.permute.xlu0 %643
    %v646 = vadd.f32 %v636, %v644
    %v647 = vtanh.pop %v646
    %649 = vrot.lane.b32.xlu0 %v647, 64
    %v650 = vpop.permute.xlu0 %649
    %v652 = vmul.f32 %v635, %v650
    %654 = vrot.lane.b32.xlu0 %v652, 32
    %v655 = vpop.permute.xlu0 %654
    %658 = vrot.lane.b32.xlu0 %v600, 64
    %v659 = vpop.permute.xlu0 %658
    %v661 = vsel %vm136, %v655, %v659
    %v663 = vsel %vm141, %v661, 0
    %665 = vmatpush.msra.mxu0 0.0
    %666 = vmatpush.msra.mxu0 0.0
    %667 = vmatpush.msra.mxu0 0.0
    %668 = vmatpush.msra.mxu0 0.0
    %669 = vmatpush.msra.mxu0 0.0
    %670 = vmatpush.msra.mxu0 0.0
    %671 = vmatpush.msra.mxu0 0.0
    %672 = vmatpush.msra.mxu0 0.0
    %673 = vmatpush.msra.mxu0 %v74
    %674 = vmatpush.msra.mxu0 %v73
    %675 = vmatpush.msra.mxu0 %v72
    %676 = vmatpush.msra.mxu0 %v71
    %677 = vmatpush.msra.mxu0 %v70
    %678 = vmatpush.msra.mxu0 %v69
    %679 = vmatpush.msra.mxu0 %v68
    %680 = vmatpush.msra.mxu0 %v67
    %681 = vmatmul.f32.gmra.mxu0 %v663
    %v682 = vpop.f32.mrf.mxu0
    %v683 = vadd.f32 %v139, %v682
    %684 = vdwg.mxu0
    %v685 = vtanh.pop %v683
    %v686 = vmul.f32 %v685, 0.5
    %v687 = vadd.f32 %v686, 0.5
    %v688 = vmul.f32 %v687, %v594
    %690 = vrot.lane.b32.xlu0 %v685, 64
    %v691 = vpop.permute.xlu0 %690
    %v693 = vmul.f32 %v687, %v691
    %695 = vrot.lane.b32.xlu0 %v693, 32
    %v696 = vpop.permute.xlu0 %695
    %v698 = vadd.f32 %v688, %v696
    %v699 = vtanh.pop %v698
    %701 = vrot.lane.b32.xlu0 %v699, 64
    %v702 = vpop.permute.xlu0 %701
    %v704 = vmul.f32 %v687, %v702
    %vm705 = vcmask 1047559
    %v706 = vsel %vm705, %v79, %v60
    %v708 = vrot.slane %v652, 2
    %709 = vrot.lane.b32.xlu0 %v708, 40
    %v710 = vpop.permute.xlu0 %709
    %v712 = vsel %vm83, %v706, %v710
    %v714 = vrot.slane %v712, 6
    %v715 = vsel %vm88, %v714, 0
    %717 = vmatpush.msra.mxu0 0.0
    %718 = vmatpush.msra.mxu0 0.0
    %719 = vmatpush.msra.mxu0 0.0
    %720 = vmatpush.msra.mxu0 0.0
    %721 = vmatpush.msra.mxu0 0.0
    %722 = vmatpush.msra.mxu0 0.0
    %723 = vmatpush.msra.mxu0 0.0
    %724 = vmatpush.msra.mxu0 0.0
    %725 = vmatpush.msra.mxu0 0.0
    %726 = vmatpush.msra.mxu0 0.0
    %727 = vmatpush.msra.mxu0 0.0
    %728 = vmatpush.msra.mxu0 %v66
    %729 = vmatpush.msra.mxu0 %v65
    %730 = vmatpush.msra.mxu0 %v64
    %731 = vmatpush.msra.mxu0 %v63
    %732 = vmatpush.msra.mxu0 %v62
    %733 = vmatmul.f32.gmra.mxu0 %v715
    %v734 = vpop.f32.mrf.mxu0
    %v735 = vadd.f32 %v86, %v734
    %736 = vdwg.mxu0
    %v737 = vtanh.pop %v735
    %v738 = vmul.f32 %v737, 0.5
    %v739 = vadd.f32 %v738, 0.5
    %v740 = vmul.f32 %v739, %v646
    %742 = vrot.lane.b32.xlu0 %v737, 64
    %v743 = vpop.permute.xlu0 %742
    %v745 = vmul.f32 %v739, %v743
    %747 = vrot.lane.b32.xlu0 %v745, 32
    %v748 = vpop.permute.xlu0 %747
    %v750 = vadd.f32 %v740, %v748
    %v751 = vtanh.pop %v750
    %753 = vrot.lane.b32.xlu0 %v751, 64
    %v754 = vpop.permute.xlu0 %753
    %v756 = vmul.f32 %v739, %v754
    %758 = vrot.lane.b32.xlu0 %v756, 32
    %v759 = vpop.permute.xlu0 %758
    %762 = vrot.lane.b32.xlu0 %v704, 64
    %v763 = vpop.permute.xlu0 %762
    %v765 = vsel %vm136, %v759, %v763
    %v767 = vsel %vm141, %v765, 0
    %769 = vmatpush.msra.mxu0 0.0
    %770 = vmatpush.msra.mxu0 0.0
    %771 = vmatpush.msra.mxu0 0.0
    %772 = vmatpush.msra.mxu0 0.0
    %773 = vmatpush.msra.mxu0 0.0
    %774 = vmatpush.msra.mxu0 0.0
    %775 = vmatpush.msra.mxu0 0.0
    %776 = vmatpush.msra.mxu0 0.0
    %777 = vmatpush.msra.mxu0 %v74
    %778 = vmatpush.msra.mxu0 %v73
    %779 = vmatpush.msra.mxu0 %v72
    %780 = vmatpush.msra.mxu0 %v71
    %781 = vmatpush.msra.mxu0 %v70
    %782 = vmatpush.msra.mxu0 %v69
    %783 = vmatpush.msra.mxu0 %v68
    %784 = vmatpush.msra.mxu0 %v67
    %785 = vmatmul.f32.gmra.mxu0 %v767
    %v786 = vpop.f32.mrf.mxu0
    %v787 = vadd.f32 %v139, %v786
    %788 = vdwg.mxu0
    %v789 = vtanh.pop %v787
    %v790 = vmul.f32 %v789, 0.5
    %v791 = vadd.f32 %v790, 0.5
    %v792 = vmul.f32 %v791, %v698
    %794 = vrot.lane.b32.xlu0 %v789, 64
    %v795 = vpop.permute.xlu0 %794
    %v797 = vmul.f32 %v791, %v795
    %799 = vrot.lane.b32.xlu0 %v797, 32
    %v800 = vpop.permute.xlu0 %799
    %v802 = vadd.f32 %v792, %v800
    %v803 = vtanh.pop %v802
    %805 = vrot.lane.b32.xlu0 %v803, 64
    %v806 = vpop.permute.xlu0 %805
    %v808 = vmul.f32 %v791, %v806
    %v811 = vrot.slane %v756, 1
    %812 = vrot.lane.b32.xlu0 %v811, 40
    %v813 = vpop.permute.xlu0 %812
    %v815 = vsel %vm83, %v60, %v813
    %v816 = vsel %vm83, %v79, %v813
    %vm819 = vcmask 1040384
    %v820 = vrot.slane %v815, 7
    %v821 = vrot.slane %v816, 7
    %v822 = vsel %vm819, %v820, %v821
    %v823 = vsel %vm88, %v822, 0
    %825 = vmatpush.msra.mxu0 0.0
    %826 = vmatpush.msra.mxu0 0.0
    %827 = vmatpush.msra.mxu0 0.0
    %828 = vmatpush.msra.mxu0 0.0
    %829 = vmatpush.msra.mxu0 0.0
    %830 = vmatpush.msra.mxu0 0.0
    %831 = vmatpush.msra.mxu0 0.0
    %832 = vmatpush.msra.mxu0 0.0
    %833 = vmatpush.msra.mxu0 0.0
    %834 = vmatpush.msra.mxu0 0.0
    %835 = vmatpush.msra.mxu0 0.0
    %836 = vmatpush.msra.mxu0 %v66
    %837 = vmatpush.msra.mxu0 %v65
    %838 = vmatpush.msra.mxu0 %v64
    %839 = vmatpush.msra.mxu0 %v63
    %840 = vmatpush.msra.mxu0 %v62
    %841 = vmatmul.f32.gmra.mxu0 %v823
    %v842 = vpop.f32.mrf.mxu0
    %v843 = vadd.f32 %v86, %v842
    %844 = vdwg.mxu0
    %v845 = vtanh.pop %v843
    %v846 = vmul.f32 %v845, 0.5
    %v847 = vadd.f32 %v846, 0.5
    %v848 = vmul.f32 %v847, %v750
    %850 = vrot.lane.b32.xlu0 %v845, 64
    %v851 = vpop.permute.xlu0 %850
    %v853 = vmul.f32 %v847, %v851
    %855 = vrot.lane.b32.xlu0 %v853, 32
    %v856 = vpop.permute.xlu0 %855
    %v858 = vadd.f32 %v848, %v856
    %v859 = vtanh.pop %v858
    %861 = vrot.lane.b32.xlu0 %v859, 64
    %v862 = vpop.permute.xlu0 %861
    %v864 = vmul.f32 %v847, %v862
    %866 = vrot.lane.b32.xlu0 %v864, 32
    %v867 = vpop.permute.xlu0 %866
    %870 = vrot.lane.b32.xlu0 %v808, 64
    %v871 = vpop.permute.xlu0 %870
    %v873 = vsel %vm136, %v867, %v871
    %v875 = vsel %vm141, %v873, 0
    %877 = vmatpush.msra.mxu0 0.0
    %878 = vmatpush.msra.mxu0 0.0
    %879 = vmatpush.msra.mxu0 0.0
    %880 = vmatpush.msra.mxu0 0.0
    %881 = vmatpush.msra.mxu0 0.0
    %882 = vmatpush.msra.mxu0 0.0
    %883 = vmatpush.msra.mxu0 0.0
    %884 = vmatpush.msra.mxu0 0.0
    %885 = vmatpush.msra.mxu0 %v74
    %886 = vmatpush.msra.mxu0 %v73
    %887 = vmatpush.msra.mxu0 %v72
    %888 = vmatpush.msra.mxu0 %v71
    %889 = vmatpush.msra.mxu0 %v70
    %890 = vmatpush.msra.mxu0 %v69
    %891 = vmatpush.msra.mxu0 %v68
    %892 = vmatpush.msra.mxu0 %v67
    %893 = vmatmul.f32.gmra.mxu0 %v875
    %v894 = vpop.f32.mrf.mxu0
    %v895 = vadd.f32 %v139, %v894
    %896 = vdwg.mxu0
    %v897 = vtanh.pop %v895
    %v898 = vmul.f32 %v897, 0.5
    %v899 = vadd.f32 %v898, 0.5
    %v900 = vmul.f32 %v899, %v802
    %902 = vrot.lane.b32.xlu0 %v897, 64
    %v903 = vpop.permute.xlu0 %902
    %v905 = vmul.f32 %v899, %v903
    %907 = vrot.lane.b32.xlu0 %v905, 32
    %v908 = vpop.permute.xlu0 %907
    %v910 = vadd.f32 %v900, %v908
    %v911 = vtanh.pop %v910
    %913 = vrot.lane.b32.xlu0 %v911, 64
    %v914 = vpop.permute.xlu0 %913
    %v916 = vmul.f32 %v899, %v914
    %v917 = vrot.slane %v184, 1
    %v919 = vrot.slane %v288, 1
    %v920 = vrot.slane %v392, 1
    %v921 = vrot.slane %v496, 1
    %v922 = vrot.slane %v600, 1
    %v923 = vrot.slane %v704, 1
    %v924 = vrot.slane %v808, 1
    %v926 = vrot.slane %v916, 1
    %v927 = vperm.slane %v288, 0
    %v928 = vperm.slane %v919, 0
    %v931 = vperm.slane %v392, 0
    %v932 = vperm.slane %v920, 0
    %v935 = vperm.slane %v496, 0
    %v936 = vperm.slane %v921, 0
    %v939 = vperm.slane %v600, 0
    %v940 = vperm.slane %v922, 0
    %v943 = vperm.slane %v704, 0
    %v944 = vperm.slane %v923, 0
    %v947 = vperm.slane %v808, 0
    %v948 = vperm.slane %v924, 0
    %v951 = vperm.slane %v916, 0
    %v952 = vperm.slane %v926, 0
    %v955 = vsel %vm819, %v184, %v927
    %v956 = vsel %vm819, %v917, %v928
    %vm957 = vcmask 1041408
    %v958 = vsel %vm957, %v955, %v931
    %v959 = vsel %vm957, %v956, %v932
    %vm960 = vcmask 1042432
    %v961 = vsel %vm960, %v958, %v935
    %v962 = vsel %vm960, %v959, %v936
    %vm963 = vcmask 1043456
    %v964 = vsel %vm963, %v961, %v939
    %v965 = vsel %vm963, %v962, %v940
    %vm966 = vcmask 1044480
    %v967 = vsel %vm966, %v964, %v943
    %v968 = vsel %vm966, %v965, %v944
    %vm969 = vcmask 1045504
    %v970 = vsel %vm969, %v967, %v947
    %v971 = vsel %vm969, %v968, %v948
    %vm972 = vcmask 1046528
    %v973 = vsel %vm972, %v970, %v951
    %v974 = vsel %vm972, %v971, %v952
    %v975 = vld [vmem:[%s5] sm:$0xff]
    %v976 = vld [vmem:[%s5 + $0x8] sm:$0xff]
    %v977 = vld [vmem:[%s5 + $0x10] sm:$0xff]
    %v978 = vld [vmem:[%s5 + $0x18] sm:$0xff]
    %v979 = vld [vmem:[#allocation2] sm:$0x1]
    %v981 = vperm.slane %v979, 0
    %985 = vrot.lane.b32.xlu0 %v973, 32
    %v986 = vpop.permute.xlu0 %985
    %987 = vrot.lane.b32.xlu0 %v974, 32
    %v988 = vpop.permute.xlu0 %987
    %v989 = vsel %vm136, %v986, 0
    %v991 = vsel %vm136, %v988, 0
    %993 = vmatpush.msra.mxu0 0.0
    %994 = vmatpush.msra.mxu0 0.0
    %995 = vmatpush.msra.mxu0 0.0
    %996 = vmatpush.msra.mxu0 0.0
    %997 = vmatpush.msra.mxu0 0.0
    %998 = vmatpush.msra.mxu0 0.0
    %999 = vmatpush.msra.mxu0 0.0
    %1000 = vmatpush.msra.mxu0 0.0
    %1001 = vmatpush.msra.mxu0 0.0
    %1002 = vmatpush.msra.mxu0 0.0
    %1003 = vmatpush.msra.mxu0 0.0
    %1004 = vmatpush.msra.mxu0 0.0
    %1005 = vmatpush.msra.mxu0 %v978
    %1006 = vmatpush.msra.mxu0 %v977
    %1007 = vmatpush.msra.mxu0 %v976
    %1008 = vmatpush.msra.mxu0 %v975
    %1009 = vmatmul.f32.gmra.mxu0 %v989
    %v1010 = vpop.f32.mrf.mxu0
    %v1011 = vadd.f32 %v981, %v1010
    %1012 = vmatmul.f32.gmra.mxu0 %v991
    %v1013 = vpop.f32.mrf.mxu0
    %v1014 = vadd.f32 %v981, %v1013
    %1015 = vdwg.mxu0
    %vm1016 = vcmask 7168
    %1017 = vst.msk [vmem:[%s7] sm:$0xff] %vm1016, %v1011
    %1018 = vst.msk [vmem:[%s7 + $0x8] sm:$0xff] %vm1016, %v1014
    // Predicated region
    $region38: #{tpu_custom_call.1} parent=1 // pred_check
      _
    $region39: #{tpu_custom_call.1} parent=1 // pred_check_branch
      %1020 = sbr.rel (0) target = $region41
    $region40: #{tpu_custom_call.1} parent=1 // pred_region
      _
    $region41: #{tpu_custom_call.1} parent=1 // pred_fallthru
      _
    // Predicated region
    $region42: #{tpu_custom_call.1} parent=1 // pred_check
      _
    $region43: #{tpu_custom_call.1} parent=1 // pred_check_branch
      %1022 = sbr.rel (0) target = $region45
    $region44: #{tpu_custom_call.1} parent=1 // pred_region
      _
    $region45: #{tpu_custom_call.1} parent=1 // pred_fallthru
      _
    %1023 = vsyncpa [#allocation4], 1
    %1024 = vsyncpa [#allocation6], 1

</llo_original>
